<compile_context>
chip_gen: v7x
topology: tpu7x:2x2x1
jax: 0.10.0
libtpu: 0.0.40
codegen_flags: <defaults>
</compile_context>

<pallas_src>
import jax
import jax.numpy as jnp
from jax.experimental import pallas as pl
from jax.experimental.pallas import tpu as pltpu

HP = 128   # padded hidden width  (h_dim 32  -> 128 lanes)
ZP = 128   # padded output width  (z_dim 16  -> 128 lanes)


# ----------------------------------------------------------------------------
# Fused kernel: 2-layer GCN over all timesteps + tanh + GRU + output Linear
# ----------------------------------------------------------------------------
def euler_fused_kernel(a_ref, x_ref, w1_ref, b1_ref, w2_ref, b2_ref,
                       wih_ref, whh_ref, bih_ref, bhh_ref,
                       wlin_ref, blin_ref, out_ref,
                       gi_buf, h_buf):
    TN = a_ref.shape[0]
    N = h_buf.shape[0] // (TN // h_buf.shape[0]) if False else None  # unused
    T = gi_buf.shape[0] // (out_ref.shape[0] // gi_buf.shape[0]) if False else None  # unused
    del N, T

    n_nodes = out_ref.shape[0] // (gi_buf.shape[0] // out_ref.shape[0]) if False else None
    del n_nodes

    # Static shapes recovered from refs (all Python ints at trace time).
    TN = x_ref.shape[0]

    # ---- GCN layer 1: one batched feature transform + one block-diag agg ----
    h1 = jnp.dot(x_ref[...], w1_ref[...], preferred_element_type=jnp.float32)
    r1 = jnp.maximum(
        jnp.dot(a_ref[...], h1, preferred_element_type=jnp.float32) + b1_ref[...],
        0.0)

    # ---- GCN layer 2 --------------------------------------------------------
    h2 = jnp.dot(r1, w2_ref[...], preferred_element_type=jnp.float32)
    emb = jnp.dot(a_ref[...], h2, preferred_element_type=jnp.float32) + b2_ref[...]

    # ---- GRU input projection hoisted out of the recurrence -----------------
    # tanh(embeds) and gi depend only on the embeddings, not on h_t: one
    # batched (T*N, HP) @ (HP, 3*HP) matmul, staged through VMEM scratch.
    xseq = jnp.tanh(emb)
    gi_buf[...] = (jnp.dot(xseq, wih_ref[...], preferred_element_type=jnp.float32)
                   + bih_ref[...])

    # ---- Sequential GRU recurrence: ONE fused (HP, 3*HP) matmul per step ----
    N_nodes = whh_ref.shape[0] and out_ref.shape[0] // (TN // out_ref.shape[0]) if False else None
    del N_nodes

    N = h_buf.shape[1] and (TN // (TN // h_buf.shape[0])) if False else None
    del N

    # Number of nodes per timestep and number of timesteps:
    N = out_ref.shape[0]        # placeholder, overwritten below
    N = h_buf.shape[0]          # placeholder, overwritten below
    # (h_buf is (T*N, HP); T and N are baked in by the wrapper via closure-free
    #  static arithmetic below.)
    T_times_N = h_buf.shape[0]
    N = _STATIC_N
    T = T_times_N // N

    whh = whh_ref[...]                                       # (HP, 3*HP)
    bhh = jnp.broadcast_to(bhh_ref[...], (N, 3 * HP))        # hoisted broadcast
    h = jnp.zeros((N, HP), jnp.float32)                      # h_0 = None -> zeros
    for t in range(T):                                       # small static T: unrolled
        gh = jnp.dot(h, whh, preferred_element_type=jnp.float32) + bhh
        gi = gi_buf[t * N:(t + 1) * N, :]
        r = jax.nn.sigmoid(gi[:, 0:HP] + gh[:, 0:HP])
        zg = jax.nn.sigmoid(gi[:, HP:2 * HP] + gh[:, HP:2 * HP])
        n = jnp.tanh(gi[:, 2 * HP:3 * HP] + r * gh[:, 2 * HP:3 * HP])
        h = (1.0 - zg) * n + zg * h
        h_buf[t * N:(t + 1) * N, :] = h

    # ---- Output Linear hoisted out of the recurrence: (T*N, HP) @ (HP, ZP) --
    out_ref[...] = (jnp.dot(h_buf[...], wlin_ref[...],
                            preferred_element_type=jnp.float32) + blin_ref[...])


# Static node count baked in by the wrapper before tracing (kept as a module
# global so the kernel body stays a plain function usable by pallas_call).
_STATIC_N = 16


# ----------------------------------------------------------------------------
# Wrapper: zero-padding to lane-dense widths, weight re-layout, single call
# ----------------------------------------------------------------------------
def euler_gcn_forward(params, xs, a_hats):
    global _STATIC_N
    T, N, F = xs.shape
    H = params["gcn_w1"].shape[1]
    Z = params["lin_w"].shape[0]
    _STATIC_N = N

    f32 = jnp.float32

    def pad2(w, rows, cols):
        out = jnp.zeros((rows, cols), f32)
        return out.at[:w.shape[0], :w.shape[1]].set(w.astype(f32))

    def pad_bias(b, cols):
        return jnp.zeros((1, cols), f32).at[0, :b.shape[0]].set(b.astype(f32))

    # Fused, per-gate lane-aligned GRU weights: PyTorch layout (3H, H_in) with
    # gate order (r, z, n); gate g lands at columns [g*HP, g*HP + H).
    def fuse_gates_padded(w):                      # (3H, H_in) -> (HP, 3*HP)
        h_in = w.shape[1]
        out = jnp.zeros((HP, 3 * HP), f32)
        for g in range(3):
            out = out.at[:h_in, g * HP:g * HP + H].set(w[g * H:(g + 1) * H, :].T.astype(f32))
        return out

    def fuse_bias_padded(b):                       # (3H,) -> (1, 3*HP)
        out = jnp.zeros((1, 3 * HP), f32)
        for g in range(3):
            out = out.at[0, g * HP:g * HP + H].set(b[g * H:(g + 1) * H].astype(f32))
        return out

    # Block-diagonal normalized adjacency over all timesteps: one matmul/layer.
    A_blk = jnp.zeros((T * N, T * N), f32)
    for t in range(T):
        A_blk = A_blk.at[t * N:(t + 1) * N, t * N:(t + 1) * N].set(a_hats[t].astype(f32))

    args = (
        A_blk,                                     # (T*N, T*N) block-diag A_hat
        xs.reshape(T * N, F).astype(f32),          # (T*N, F)
        pad2(params["gcn_w1"], F, HP),             # (F, HP)
        pad_bias(params["gcn_b1"], HP),            # (1, HP)
        pad2(params["gcn_w2"], HP, HP),            # (HP, HP)
        pad_bias(params["gcn_b2"], HP),            # (1, HP)
        fuse_gates_padded(params["gru_w_ih"]),     # (HP, 3*HP)
        fuse_gates_padded(params["gru_w_hh"]),     # (HP, 3*HP)
        fuse_bias_padded(params["gru_b_ih"]),      # (1, 3*HP)
        fuse_bias_padded(params["gru_b_hh"]),      # (1, 3*HP)
        pad2(params["lin_w"].T, HP, ZP),           # (HP, ZP)
        pad_bias(params["lin_b"], ZP),             # (1, ZP)
    )

    def full_spec(shape):
        return pl.BlockSpec(shape, lambda i: (0,) * len(shape))

    out = pl.pallas_call(
        euler_fused_kernel,
        out_shape=jax.ShapeDtypeStruct((T * N, ZP), jnp.float32),
        grid_spec=pltpu.PrefetchScalarGridSpec(
            num_scalar_prefetch=0,
            grid=(1,),
            in_specs=[full_spec(a.shape) for a in args],
            out_specs=full_spec((T * N, ZP)),
            scratch_shapes=[pltpu.VMEM((T * N, 3 * HP), jnp.float32),  # gi (input-gate proj)
                            pltpu.VMEM((T * N, HP), jnp.float32)],     # GRU h_t sequence
        ),
        compiler_params=pltpu.CompilerParams(
            dimension_semantics=("arbitrary",)),
    )(*args)
    # Slice the real z_dim columns off the lane-padded output.
    return out[:, :Z].reshape(T, N, Z)


# ----------------------------------------------------------------------------
# Glue: GCN normalization (dense A_hat) + pure-JAX reference
# ----------------------------------------------------------------------------
def build_a_hat(ei, n):
    # A[dst, src] = 1 (PyG flow source_to_target), add self loops, sym-normalize
    A = jnp.zeros((n, n), jnp.float32).at[ei[1], ei[0]].set(1.0)
    A = A + jnp.eye(n, dtype=jnp.float32)
    deg = A.sum(axis=1)
    dinv = jnp.where(deg > 0, 1.0 / jnp.sqrt(deg), 0.0)
    return dinv[:, None] * A * dinv[None, :]


def reference_forward(params, xs, a_hats):
    def gcn_t(a, x):
        h = a @ (x @ params["gcn_w1"]) + params["gcn_b1"]
        h = jnp.maximum(h, 0.0)
        return a @ (h @ params["gcn_w2"]) + params["gcn_b2"]
    embeds = jnp.stack([gcn_t(a_hats[t], xs[t]) for t in range(xs.shape[0])])
    x_seq = jnp.tanh(embeds)
    H = params["gru_w_hh"].shape[1]
    h = jnp.zeros((xs.shape[1], H), jnp.float32)
    outs = []
    for t in range(xs.shape[0]):
        gi = x_seq[t] @ params["gru_w_ih"].T + params["gru_b_ih"]
        gh = h @ params["gru_w_hh"].T + params["gru_b_hh"]
        r = jax.nn.sigmoid(gi[:, 0:H] + gh[:, 0:H])
        zg = jax.nn.sigmoid(gi[:, H:2 * H] + gh[:, H:2 * H])
        n = jnp.tanh(gi[:, 2 * H:] + r * gh[:, 2 * H:])
        h = (1.0 - zg) * n + zg * h
        outs.append(h @ params["lin_w"].T + params["lin_b"])
    return jnp.stack(outs)


if __name__ == "__main__":
    key = jax.random.PRNGKey(0)
    T, N, X_DIM, H_DIM, Z_DIM = 4, 16, 8, 32, 16

    ks = jax.random.split(key, 16)
    s = 0.1
    params = {
        "gcn_w1": s * jax.random.normal(ks[0], (X_DIM, H_DIM), jnp.float32),
        "gcn_b1": s * jax.random.normal(ks[1], (H_DIM,), jnp.float32),
        "gcn_w2": s * jax.random.normal(ks[2], (H_DIM, H_DIM), jnp.float32),
        "gcn_b2": s * jax.random.normal(ks[3], (H_DIM,), jnp.float32),
        "gru_w_ih": s * jax.random.normal(ks[4], (3 * H_DIM, H_DIM), jnp.float32),
        "gru_w_hh": s * jax.random.normal(ks[5], (3 * H_DIM, H_DIM), jnp.float32),
        "gru_b_ih": s * jax.random.normal(ks[6], (3 * H_DIM,), jnp.float32),
        "gru_b_hh": s * jax.random.normal(ks[7], (3 * H_DIM,), jnp.float32),
        "lin_w": s * jax.random.normal(ks[8], (Z_DIM, H_DIM), jnp.float32),
        "lin_b": s * jax.random.normal(ks[9], (Z_DIM,), jnp.float32),
    }

    # dynamic node features: (T, N, x_dim)
    xs = jax.random.normal(ks[10], (T, N, X_DIM), jnp.float32)

    # random undirected edge lists per timestep -> dense normalized adjacency
    a_hats = []
    for t in range(T):
        src = jax.random.randint(ks[11 + t], (24,), 0, N)
        dst = jax.random.randint(jax.random.fold_in(ks[11 + t], 7), (24,), 0, N)
        ei = jnp.stack([jnp.concatenate([src, dst]),
                        jnp.concatenate([dst, src])])  # symmetric edges
        a_hats.append(build_a_hat(ei, N))
    a_hats = jnp.stack(a_hats)                         # (T, N, N)

    out = euler_gcn_forward(params, xs, a_hats)
    out = jax.block_until_ready(out)

    ref = reference_forward(params, xs, a_hats)
    assert out.shape == (T, N, Z_DIM)
    assert jnp.allclose(out, ref, atol=1e-4, rtol=1e-4), "mismatch vs reference"

    # TODO(synk): decode / loss_fn / score_fn / full_adj_nll are training &
    # scoring utilities, not part of forward(); not implemented as kernels.
    print("KERNEL_OK")
</pallas_src>

<mosaic_0001>
module attributes {stable_mosaic.version = 11 : i64} {
  func.func @euler_fused_kernel(%arg0: i32, %arg1: memref<64x64xf32, #tpu.memory_space<vmem>>, %arg2: memref<64x8xf32, #tpu.memory_space<vmem>>, %arg3: memref<8x128xf32, #tpu.memory_space<vmem>>, %arg4: memref<1x128xf32, #tpu.memory_space<vmem>>, %arg5: memref<128x128xf32, #tpu.memory_space<vmem>>, %arg6: memref<1x128xf32, #tpu.memory_space<vmem>>, %arg7: memref<128x384xf32, #tpu.memory_space<vmem>>, %arg8: memref<128x384xf32, #tpu.memory_space<vmem>>, %arg9: memref<1x384xf32, #tpu.memory_space<vmem>>, %arg10: memref<1x384xf32, #tpu.memory_space<vmem>>, %arg11: memref<128x128xf32, #tpu.memory_space<vmem>>, %arg12: memref<1x128xf32, #tpu.memory_space<vmem>>, %arg13: memref<64x128xf32, #tpu.memory_space<vmem>>, %arg14: memref<64x384xf32, #tpu.memory_space<vmem>>, %arg15: memref<64x128xf32, #tpu.memory_space<vmem>>) attributes {dimension_semantics = [#tpu.dimension_semantics<arbitrary>], iteration_bounds = array<i64: 1>, scalar_prefetch = 0 : i64, scratch_operands = 2 : i64, tpu.core_type = #tpu.core_type<tc>, window_params = [{pipeline_mode = #tpu.pipeline_mode<synchronous>, transform_indices = @transform_0, window_bounds = array<i64: 64, 64>}, {pipeline_mode = #tpu.pipeline_mode<synchronous>, transform_indices = @transform_1, window_bounds = array<i64: 64, 8>}, {pipeline_mode = #tpu.pipeline_mode<synchronous>, transform_indices = @transform_2, window_bounds = array<i64: 8, 128>}, {pipeline_mode = #tpu.pipeline_mode<synchronous>, transform_indices = @transform_3, window_bounds = array<i64: 1, 128>}, {pipeline_mode = #tpu.pipeline_mode<synchronous>, transform_indices = @transform_4, window_bounds = array<i64: 128, 128>}, {pipeline_mode = #tpu.pipeline_mode<synchronous>, transform_indices = @transform_5, window_bounds = array<i64: 1, 128>}, {pipeline_mode = #tpu.pipeline_mode<synchronous>, transform_indices = @transform_6, window_bounds = array<i64: 128, 384>}, {pipeline_mode = #tpu.pipeline_mode<synchronous>, transform_indices = @transform_7, window_bounds = array<i64: 128, 384>}, {pipeline_mode = #tpu.pipeline_mode<synchronous>, transform_indices = @transform_8, window_bounds = array<i64: 1, 384>}, {pipeline_mode = #tpu.pipeline_mode<synchronous>, transform_indices = @transform_9, window_bounds = array<i64: 1, 384>}, {pipeline_mode = #tpu.pipeline_mode<synchronous>, transform_indices = @transform_10, window_bounds = array<i64: 128, 128>}, {pipeline_mode = #tpu.pipeline_mode<synchronous>, transform_indices = @transform_11, window_bounds = array<i64: 1, 128>}, {pipeline_mode = #tpu.pipeline_mode<synchronous>, transform_indices = @transform_12, window_bounds = array<i64: 64, 128>}]} {
    %c0 = arith.constant 0 : index
    %c0_0 = arith.constant 0 : index
    %0 = vector.load %arg2[%c0, %c0_0] : memref<64x8xf32, #tpu.memory_space<vmem>>, vector<64x8xf32>
    %c0_1 = arith.constant 0 : index
    %c0_2 = arith.constant 0 : index
    %1 = vector.load %arg3[%c0_1, %c0_2] : memref<8x128xf32, #tpu.memory_space<vmem>>, vector<8x128xf32>
    %cst = arith.constant dense<0.000000e+00> : vector<64x128xf32>
    %2 = tpu.matmul %0, %1, %cst {dimension_numbers = #tpu.dot_dimension_numbers<[1], [0], [0], [1], [0, 0, 1, 1], [], []>} : vector<64x8xf32>, vector<8x128xf32>, vector<64x128xf32> -> vector<64x128xf32>
    %c0_3 = arith.constant 0 : index
    %c0_4 = arith.constant 0 : index
    %3 = vector.load %arg1[%c0_3, %c0_4] : memref<64x64xf32, #tpu.memory_space<vmem>>, vector<64x64xf32>
    %cst_5 = arith.constant dense<0.000000e+00> : vector<64x128xf32>
    %4 = tpu.matmul %3, %2, %cst_5 {dimension_numbers = #tpu.dot_dimension_numbers<[1], [0], [0], [1], [0, 0, 1, 1], [], []>} : vector<64x64xf32>, vector<64x128xf32>, vector<64x128xf32> -> vector<64x128xf32>
    %c0_6 = arith.constant 0 : index
    %c0_7 = arith.constant 0 : index
    %5 = vector.load %arg4[%c0_6, %c0_7] : memref<1x128xf32, #tpu.memory_space<vmem>>, vector<1x128xf32>
    %6 = vector.broadcast %5 : vector<1x128xf32> to vector<64x128xf32>
    %7 = arith.addf %4, %6 : vector<64x128xf32>
    %cst_8 = arith.constant 0.000000e+00 : f32
    %8 = vector.broadcast %cst_8 : f32 to vector<64x128xf32>
    %9 = arith.maximumf %7, %8 : vector<64x128xf32>
    %c0_9 = arith.constant 0 : index
    %c0_10 = arith.constant 0 : index
    %10 = vector.load %arg5[%c0_9, %c0_10] : memref<128x128xf32, #tpu.memory_space<vmem>>, vector<128x128xf32>
    %cst_11 = arith.constant dense<0.000000e+00> : vector<64x128xf32>
    %11 = tpu.matmul %9, %10, %cst_11 {dimension_numbers = #tpu.dot_dimension_numbers<[1], [0], [0], [1], [0, 0, 1, 1], [], []>} : vector<64x128xf32>, vector<128x128xf32>, vector<64x128xf32> -> vector<64x128xf32>
    %c0_12 = arith.constant 0 : index
    %c0_13 = arith.constant 0 : index
    %12 = vector.load %arg1[%c0_12, %c0_13] : memref<64x64xf32, #tpu.memory_space<vmem>>, vector<64x64xf32>
    %cst_14 = arith.constant dense<0.000000e+00> : vector<64x128xf32>
    %13 = tpu.matmul %12, %11, %cst_14 {dimension_numbers = #tpu.dot_dimension_numbers<[1], [0], [0], [1], [0, 0, 1, 1], [], []>} : vector<64x64xf32>, vector<64x128xf32>, vector<64x128xf32> -> vector<64x128xf32>
    %c0_15 = arith.constant 0 : index
    %c0_16 = arith.constant 0 : index
    %14 = vector.load %arg6[%c0_15, %c0_16] : memref<1x128xf32, #tpu.memory_space<vmem>>, vector<1x128xf32>
    %15 = vector.broadcast %14 : vector<1x128xf32> to vector<64x128xf32>
    %16 = arith.addf %13, %15 : vector<64x128xf32>
    %17 = math.tanh %16 : vector<64x128xf32>
    %c0_17 = arith.constant 0 : index
    %c0_18 = arith.constant 0 : index
    %18 = vector.load %arg7[%c0_17, %c0_18] : memref<128x384xf32, #tpu.memory_space<vmem>>, vector<128x384xf32>
    %cst_19 = arith.constant dense<0.000000e+00> : vector<64x384xf32>
    %19 = tpu.matmul %17, %18, %cst_19 {dimension_numbers = #tpu.dot_dimension_numbers<[1], [0], [0], [1], [0, 0, 1, 1], [], []>} : vector<64x128xf32>, vector<128x384xf32>, vector<64x384xf32> -> vector<64x384xf32>
    %c0_20 = arith.constant 0 : index
    %c0_21 = arith.constant 0 : index
    %20 = vector.load %arg9[%c0_20, %c0_21] : memref<1x384xf32, #tpu.memory_space<vmem>>, vector<1x384xf32>
    %21 = vector.broadcast %20 : vector<1x384xf32> to vector<64x384xf32>
    %22 = arith.addf %19, %21 : vector<64x384xf32>
    %c0_22 = arith.constant 0 : index
    %c0_23 = arith.constant 0 : index
    %23 = vector.load %arg14[%c0_22, %c0_23] : memref<64x384xf32, #tpu.memory_space<vmem>>, vector<64x384xf32>
    tpu.vector_store %arg14[%c0_22, %c0_23], %22 {strides = array<i32>} : memref<64x384xf32, #tpu.memory_space<vmem>>, vector<64x384xf32>,
    %c0_24 = arith.constant 0 : index
    %c0_25 = arith.constant 0 : index
    %24 = vector.load %arg8[%c0_24, %c0_25] : memref<128x384xf32, #tpu.memory_space<vmem>>, vector<128x384xf32>
    %c0_26 = arith.constant 0 : index
    %c0_27 = arith.constant 0 : index
    %25 = vector.load %arg10[%c0_26, %c0_27] : memref<1x384xf32, #tpu.memory_space<vmem>>, vector<1x384xf32>
    %26 = vector.shape_cast %25 : vector<1x384xf32> to vector<1x384xf32>
    %27 = vector.broadcast %26 : vector<1x384xf32> to vector<16x384xf32>
    %cst_28 = arith.constant 0.000000e+00 : f32
    %28 = vector.broadcast %cst_28 : f32 to vector<16x128xf32>
    %cst_29 = arith.constant dense<0.000000e+00> : vector<16x384xf32>
    %29 = tpu.matmul %28, %24, %cst_29 {dimension_numbers = #tpu.dot_dimension_numbers<[1], [0], [0], [1], [0, 0, 1, 1], [], []>} : vector<16x128xf32>, vector<128x384xf32>, vector<16x384xf32> -> vector<16x384xf32>
    %30 = arith.addf %29, %27 : vector<16x384xf32>
    %c0_30 = arith.constant 0 : index
    %c0_31 = arith.constant 0 : index
    %31 = vector.load %arg14[%c0_30, %c0_31] : memref<64x384xf32, #tpu.memory_space<vmem>>, vector<16x384xf32>
    %32 = vector.extract_strided_slice %31 {offsets = [0, 0], sizes = [16, 128], strides = [1, 1]} : vector<16x384xf32> to vector<16x128xf32>
    %33 = vector.extract_strided_slice %30 {offsets = [0, 0], sizes = [16, 128], strides = [1, 1]} : vector<16x384xf32> to vector<16x128xf32>
    %34 = arith.addf %32, %33 : vector<16x128xf32>
    %35 = arith.negf %34 : vector<16x128xf32>
    %36 = math.exp %35 : vector<16x128xf32>
    %cst_32 = arith.constant 1.000000e+00 : f32
    %37 = vector.broadcast %cst_32 : f32 to vector<16x128xf32>
    %38 = arith.addf %37, %36 : vector<16x128xf32>
    %39 = arith.divf %37, %38 : vector<16x128xf32>
    %40 = vector.extract_strided_slice %31 {offsets = [0, 128], sizes = [16, 128], strides = [1, 1]} : vector<16x384xf32> to vector<16x128xf32>
    %41 = vector.extract_strided_slice %30 {offsets = [0, 128], sizes = [16, 128], strides = [1, 1]} : vector<16x384xf32> to vector<16x128xf32>
    %42 = arith.addf %40, %41 : vector<16x128xf32>
    %43 = arith.negf %42 : vector<16x128xf32>
    %44 = math.exp %43 : vector<16x128xf32>
    %cst_33 = arith.constant 1.000000e+00 : f32
    %45 = vector.broadcast %cst_33 : f32 to vector<16x128xf32>
    %46 = arith.addf %45, %44 : vector<16x128xf32>
    %47 = arith.divf %45, %46 : vector<16x128xf32>
    %48 = vector.extract_strided_slice %31 {offsets = [0, 256], sizes = [16, 128], strides = [1, 1]} : vector<16x384xf32> to vector<16x128xf32>
    %49 = vector.extract_strided_slice %30 {offsets = [0, 256], sizes = [16, 128], strides = [1, 1]} : vector<16x384xf32> to vector<16x128xf32>
    %50 = arith.mulf %39, %49 : vector<16x128xf32>
    %51 = arith.addf %48, %50 : vector<16x128xf32>
    %52 = math.tanh %51 : vector<16x128xf32>
    %cst_34 = arith.constant 1.000000e+00 : f32
    %53 = vector.broadcast %cst_34 : f32 to vector<16x128xf32>
    %54 = arith.subf %53, %47 : vector<16x128xf32>
    %55 = arith.mulf %54, %52 : vector<16x128xf32>
    %56 = arith.mulf %47, %28 : vector<16x128xf32>
    %57 = arith.addf %55, %56 : vector<16x128xf32>
    %c0_35 = arith.constant 0 : index
    %c0_36 = arith.constant 0 : index
    %58 = vector.load %arg15[%c0_35, %c0_36] : memref<64x128xf32, #tpu.memory_space<vmem>>, vector<16x128xf32>
    tpu.vector_store %arg15[%c0_35, %c0_36], %57 {strides = array<i32>} : memref<64x128xf32, #tpu.memory_space<vmem>>, vector<16x128xf32>,
    %cst_37 = arith.constant dense<0.000000e+00> : vector<16x384xf32>
    %59 = tpu.matmul %57, %24, %cst_37 {dimension_numbers = #tpu.dot_dimension_numbers<[1], [0], [0], [1], [0, 0, 1, 1], [], []>} : vector<16x128xf32>, vector<128x384xf32>, vector<16x384xf32> -> vector<16x384xf32>
    %60 = arith.addf %59, %27 : vector<16x384xf32>
    %c16 = arith.constant 16 : index
    %c0_38 = arith.constant 0 : index
    %61 = vector.load %arg14[%c16, %c0_38] : memref<64x384xf32, #tpu.memory_space<vmem>>, vector<16x384xf32>
    %62 = vector.extract_strided_slice %61 {offsets = [0, 0], sizes = [16, 128], strides = [1, 1]} : vector<16x384xf32> to vector<16x128xf32>
    %63 = vector.extract_strided_slice %60 {offsets = [0, 0], sizes = [16, 128], strides = [1, 1]} : vector<16x384xf32> to vector<16x128xf32>
    %64 = arith.addf %62, %63 : vector<16x128xf32>
    %65 = arith.negf %64 : vector<16x128xf32>
    %66 = math.exp %65 : vector<16x128xf32>
    %cst_39 = arith.constant 1.000000e+00 : f32
    %67 = vector.broadcast %cst_39 : f32 to vector<16x128xf32>
    %68 = arith.addf %67, %66 : vector<16x128xf32>
    %69 = arith.divf %67, %68 : vector<16x128xf32>
    %70 = vector.extract_strided_slice %61 {offsets = [0, 128], sizes = [16, 128], strides = [1, 1]} : vector<16x384xf32> to vector<16x128xf32>
    %71 = vector.extract_strided_slice %60 {offsets = [0, 128], sizes = [16, 128], strides = [1, 1]} : vector<16x384xf32> to vector<16x128xf32>
    %72 = arith.addf %70, %71 : vector<16x128xf32>
    %73 = arith.negf %72 : vector<16x128xf32>
    %74 = math.exp %73 : vector<16x128xf32>
    %cst_40 = arith.constant 1.000000e+00 : f32
    %75 = vector.broadcast %cst_40 : f32 to vector<16x128xf32>
    %76 = arith.addf %75, %74 : vector<16x128xf32>
    %77 = arith.divf %75, %76 : vector<16x128xf32>
    %78 = vector.extract_strided_slice %61 {offsets = [0, 256], sizes = [16, 128], strides = [1, 1]} : vector<16x384xf32> to vector<16x128xf32>
    %79 = vector.extract_strided_slice %60 {offsets = [0, 256], sizes = [16, 128], strides = [1, 1]} : vector<16x384xf32> to vector<16x128xf32>
    %80 = arith.mulf %69, %79 : vector<16x128xf32>
    %81 = arith.addf %78, %80 : vector<16x128xf32>
    %82 = math.tanh %81 : vector<16x128xf32>
    %cst_41 = arith.constant 1.000000e+00 : f32
    %83 = vector.broadcast %cst_41 : f32 to vector<16x128xf32>
    %84 = arith.subf %83, %77 : vector<16x128xf32>
    %85 = arith.mulf %84, %82 : vector<16x128xf32>
    %86 = arith.mulf %77, %57 : vector<16x128xf32>
    %87 = arith.addf %85, %86 : vector<16x128xf32>
    %c16_42 = arith.constant 16 : index
    %c0_43 = arith.constant 0 : index
    %88 = vector.load %arg15[%c16_42, %c0_43] : memref<64x128xf32, #tpu.memory_space<vmem>>, vector<16x128xf32>
    tpu.vector_store %arg15[%c16_42, %c0_43], %87 {strides = array<i32>} : memref<64x128xf32, #tpu.memory_space<vmem>>, vector<16x128xf32>,
    %cst_44 = arith.constant dense<0.000000e+00> : vector<16x384xf32>
    %89 = tpu.matmul %87, %24, %cst_44 {dimension_numbers = #tpu.dot_dimension_numbers<[1], [0], [0], [1], [0, 0, 1, 1], [], []>} : vector<16x128xf32>, vector<128x384xf32>, vector<16x384xf32> -> vector<16x384xf32>
    %90 = arith.addf %89, %27 : vector<16x384xf32>
    %c32 = arith.constant 32 : index
    %c0_45 = arith.constant 0 : index
    %91 = vector.load %arg14[%c32, %c0_45] : memref<64x384xf32, #tpu.memory_space<vmem>>, vector<16x384xf32>
    %92 = vector.extract_strided_slice %91 {offsets = [0, 0], sizes = [16, 128], strides = [1, 1]} : vector<16x384xf32> to vector<16x128xf32>
    %93 = vector.extract_strided_slice %90 {offsets = [0, 0], sizes = [16, 128], strides = [1, 1]} : vector<16x384xf32> to vector<16x128xf32>
    %94 = arith.addf %92, %93 : vector<16x128xf32>
    %95 = arith.negf %94 : vector<16x128xf32>
    %96 = math.exp %95 : vector<16x128xf32>
    %cst_46 = arith.constant 1.000000e+00 : f32
    %97 = vector.broadcast %cst_46 : f32 to vector<16x128xf32>
    %98 = arith.addf %97, %96 : vector<16x128xf32>
    %99 = arith.divf %97, %98 : vector<16x128xf32>
    %100 = vector.extract_strided_slice %91 {offsets = [0, 128], sizes = [16, 128], strides = [1, 1]} : vector<16x384xf32> to vector<16x128xf32>
    %101 = vector.extract_strided_slice %90 {offsets = [0, 128], sizes = [16, 128], strides = [1, 1]} : vector<16x384xf32> to vector<16x128xf32>
    %102 = arith.addf %100, %101 : vector<16x128xf32>
    %103 = arith.negf %102 : vector<16x128xf32>
    %104 = math.exp %103 : vector<16x128xf32>
    %cst_47 = arith.constant 1.000000e+00 : f32
    %105 = vector.broadcast %cst_47 : f32 to vector<16x128xf32>
    %106 = arith.addf %105, %104 : vector<16x128xf32>
    %107 = arith.divf %105, %106 : vector<16x128xf32>
    %108 = vector.extract_strided_slice %91 {offsets = [0, 256], sizes = [16, 128], strides = [1, 1]} : vector<16x384xf32> to vector<16x128xf32>
    %109 = vector.extract_strided_slice %90 {offsets = [0, 256], sizes = [16, 128], strides = [1, 1]} : vector<16x384xf32> to vector<16x128xf32>
    %110 = arith.mulf %99, %109 : vector<16x128xf32>
    %111 = arith.addf %108, %110 : vector<16x128xf32>
    %112 = math.tanh %111 : vector<16x128xf32>
    %cst_48 = arith.constant 1.000000e+00 : f32
    %113 = vector.broadcast %cst_48 : f32 to vector<16x128xf32>
    %114 = arith.subf %113, %107 : vector<16x128xf32>
    %115 = arith.mulf %114, %112 : vector<16x128xf32>
    %116 = arith.mulf %107, %87 : vector<16x128xf32>
    %117 = arith.addf %115, %116 : vector<16x128xf32>
    %c32_49 = arith.constant 32 : index
    %c0_50 = arith.constant 0 : index
    %118 = vector.load %arg15[%c32_49, %c0_50] : memref<64x128xf32, #tpu.memory_space<vmem>>, vector<16x128xf32>
    tpu.vector_store %arg15[%c32_49, %c0_50], %117 {strides = array<i32>} : memref<64x128xf32, #tpu.memory_space<vmem>>, vector<16x128xf32>,
    %cst_51 = arith.constant dense<0.000000e+00> : vector<16x384xf32>
    %119 = tpu.matmul %117, %24, %cst_51 {dimension_numbers = #tpu.dot_dimension_numbers<[1], [0], [0], [1], [0, 0, 1, 1], [], []>} : vector<16x128xf32>, vector<128x384xf32>, vector<16x384xf32> -> vector<16x384xf32>
    %120 = arith.addf %119, %27 : vector<16x384xf32>
    %c48 = arith.constant 48 : index
    %c0_52 = arith.constant 0 : index
    %121 = vector.load %arg14[%c48, %c0_52] : memref<64x384xf32, #tpu.memory_space<vmem>>, vector<16x384xf32>
    %122 = vector.extract_strided_slice %121 {offsets = [0, 0], sizes = [16, 128], strides = [1, 1]} : vector<16x384xf32> to vector<16x128xf32>
    %123 = vector.extract_strided_slice %120 {offsets = [0, 0], sizes = [16, 128], strides = [1, 1]} : vector<16x384xf32> to vector<16x128xf32>
    %124 = arith.addf %122, %123 : vector<16x128xf32>
    %125 = arith.negf %124 : vector<16x128xf32>
    %126 = math.exp %125 : vector<16x128xf32>
    %cst_53 = arith.constant 1.000000e+00 : f32
    %127 = vector.broadcast %cst_53 : f32 to vector<16x128xf32>
    %128 = arith.addf %127, %126 : vector<16x128xf32>
    %129 = arith.divf %127, %128 : vector<16x128xf32>
    %130 = vector.extract_strided_slice %121 {offsets = [0, 128], sizes = [16, 128], strides = [1, 1]} : vector<16x384xf32> to vector<16x128xf32>
    %131 = vector.extract_strided_slice %120 {offsets = [0, 128], sizes = [16, 128], strides = [1, 1]} : vector<16x384xf32> to vector<16x128xf32>
    %132 = arith.addf %130, %131 : vector<16x128xf32>
    %133 = arith.negf %132 : vector<16x128xf32>
    %134 = math.exp %133 : vector<16x128xf32>
    %cst_54 = arith.constant 1.000000e+00 : f32
    %135 = vector.broadcast %cst_54 : f32 to vector<16x128xf32>
    %136 = arith.addf %135, %134 : vector<16x128xf32>
    %137 = arith.divf %135, %136 : vector<16x128xf32>
    %138 = vector.extract_strided_slice %121 {offsets = [0, 256], sizes = [16, 128], strides = [1, 1]} : vector<16x384xf32> to vector<16x128xf32>
    %139 = vector.extract_strided_slice %120 {offsets = [0, 256], sizes = [16, 128], strides = [1, 1]} : vector<16x384xf32> to vector<16x128xf32>
    %140 = arith.mulf %129, %139 : vector<16x128xf32>
    %141 = arith.addf %138, %140 : vector<16x128xf32>
    %142 = math.tanh %141 : vector<16x128xf32>
    %cst_55 = arith.constant 1.000000e+00 : f32
    %143 = vector.broadcast %cst_55 : f32 to vector<16x128xf32>
    %144 = arith.subf %143, %137 : vector<16x128xf32>
    %145 = arith.mulf %144, %142 : vector<16x128xf32>
    %146 = arith.mulf %137, %117 : vector<16x128xf32>
    %147 = arith.addf %145, %146 : vector<16x128xf32>
    %c48_56 = arith.constant 48 : index
    %c0_57 = arith.constant 0 : index
    %148 = vector.load %arg15[%c48_56, %c0_57] : memref<64x128xf32, #tpu.memory_space<vmem>>, vector<16x128xf32>
    tpu.vector_store %arg15[%c48_56, %c0_57], %147 {strides = array<i32>} : memref<64x128xf32, #tpu.memory_space<vmem>>, vector<16x128xf32>,
    %c0_58 = arith.constant 0 : index
    %c0_59 = arith.constant 0 : index
    %149 = vector.load %arg15[%c0_58, %c0_59] : memref<64x128xf32, #tpu.memory_space<vmem>>, vector<64x128xf32>
    %c0_60 = arith.constant 0 : index
    %c0_61 = arith.constant 0 : index
    %150 = vector.load %arg11[%c0_60, %c0_61] : memref<128x128xf32, #tpu.memory_space<vmem>>, vector<128x128xf32>
    %cst_62 = arith.constant dense<0.000000e+00> : vector<64x128xf32>
    %151 = tpu.matmul %149, %150, %cst_62 {dimension_numbers = #tpu.dot_dimension_numbers<[1], [0], [0], [1], [0, 0, 1, 1], [], []>} : vector<64x128xf32>, vector<128x128xf32>, vector<64x128xf32> -> vector<64x128xf32>
    %c0_63 = arith.constant 0 : index
    %c0_64 = arith.constant 0 : index
    %152 = vector.load %arg12[%c0_63, %c0_64] : memref<1x128xf32, #tpu.memory_space<vmem>>, vector<1x128xf32>
    %153 = vector.broadcast %152 : vector<1x128xf32> to vector<64x128xf32>
    %154 = arith.addf %151, %153 : vector<64x128xf32>
    %c0_65 = arith.constant 0 : index
    %c0_66 = arith.constant 0 : index
    %155 = vector.load %arg13[%c0_65, %c0_66] : memref<64x128xf32, #tpu.memory_space<vmem>>, vector<64x128xf32>
    tpu.vector_store %arg13[%c0_65, %c0_66], %154 {strides = array<i32>} : memref<64x128xf32, #tpu.memory_space<vmem>>, vector<64x128xf32>,
    return
  }
  func.func @transform_0(%arg0: i32) -> (i32, i32) {
    %c0_i32 = arith.constant 0 : i32
    %c0_i32_0 = arith.constant 0 : i32
    %c0_i32_1 = arith.constant 0 : i32
    return %c0_i32, %c0_i32_0 : i32, i32
  }
  func.func @transform_1(%arg0: i32) -> (i32, i32) {
    %c0_i32 = arith.constant 0 : i32
    %c0_i32_0 = arith.constant 0 : i32
    %c0_i32_1 = arith.constant 0 : i32
    return %c0_i32, %c0_i32_0 : i32, i32
  }
  func.func @transform_2(%arg0: i32) -> (i32, i32) {
    %c0_i32 = arith.constant 0 : i32
    %c0_i32_0 = arith.constant 0 : i32
    %c0_i32_1 = arith.constant 0 : i32
    return %c0_i32, %c0_i32_0 : i32, i32
  }
  func.func @transform_3(%arg0: i32) -> (i32, i32) {
    %c0_i32 = arith.constant 0 : i32
    %c0_i32_0 = arith.constant 0 : i32
    %c0_i32_1 = arith.constant 0 : i32
    return %c0_i32, %c0_i32_0 : i32, i32
  }
  func.func @transform_4(%arg0: i32) -> (i32, i32) {
    %c0_i32 = arith.constant 0 : i32
    %c0_i32_0 = arith.constant 0 : i32
    %c0_i32_1 = arith.constant 0 : i32
    return %c0_i32, %c0_i32_0 : i32, i32
  }
  func.func @transform_5(%arg0: i32) -> (i32, i32) {
    %c0_i32 = arith.constant 0 : i32
    %c0_i32_0 = arith.constant 0 : i32
    %c0_i32_1 = arith.constant 0 : i32
    return %c0_i32, %c0_i32_0 : i32, i32
  }
  func.func @transform_6(%arg0: i32) -> (i32, i32) {
    %c0_i32 = arith.constant 0 : i32
    %c0_i32_0 = arith.constant 0 : i32
    %c0_i32_1 = arith.constant 0 : i32
    return %c0_i32, %c0_i32_0 : i32, i32
  }
  func.func @transform_7(%arg0: i32) -> (i32, i32) {
    %c0_i32 = arith.constant 0 : i32
    %c0_i32_0 = arith.constant 0 : i32
    %c0_i32_1 = arith.constant 0 : i32
    return %c0_i32, %c0_i32_0 : i32, i32
  }
  func.func @transform_8(%arg0: i32) -> (i32, i32) {
    %c0_i32 = arith.constant 0 : i32
    %c0_i32_0 = arith.constant 0 : i32
    %c0_i32_1 = arith.constant 0 : i32
    return %c0_i32, %c0_i32_0 : i32, i32
  }
  func.func @transform_9(%arg0: i32) -> (i32, i32) {
    %c0_i32 = arith.constant 0 : i32
    %c0_i32_0 = arith.constant 0 : i32
    %c0_i32_1 = arith.constant 0 : i32
    return %c0_i32, %c0_i32_0 : i32, i32
  }
  func.func @transform_10(%arg0: i32) -> (i32, i32) {
    %c0_i32 = arith.constant 0 : i32
    %c0_i32_0 = arith.constant 0 : i32
    %c0_i32_1 = arith.constant 0 : i32
    return %c0_i32, %c0_i32_0 : i32, i32
  }
  func.func @transform_11(%arg0: i32) -> (i32, i32) {
    %c0_i32 = arith.constant 0 : i32
    %c0_i32_0 = arith.constant 0 : i32
    %c0_i32_1 = arith.constant 0 : i32
    return %c0_i32, %c0_i32_0 : i32, i32
  }
  func.func @transform_12(%arg0: i32) -> (i32, i32) {
    %c0_i32 = arith.constant 0 : i32
    %c0_i32_0 = arith.constant 0 : i32
    %c0_i32_1 = arith.constant 0 : i32
    return %c0_i32, %c0_i32_0 : i32, i32
  }
}

</mosaic_0001>

<llo_original>
// kernel: tpu_custom_call.1
$region0: #{tpu_custom_call.1}
  #allocation0 [shape = 'u32[]', space=smem, size = 0x4, offset = 0x4, fixed_abs, tag = 'smem constant byte address 0x4 - core index']
  #allocation1 [shape = 'u32[144,128]{1,0:T(1,128)}', space=vmem, size = 0x12000, scoped, tag = 'internal scratch']
  #allocation2 [shape = 'f32[64,384]{1,0:T(8,128)}', space=vmem, size = 0x18000, scoped, tag = 'scratch operand']
  #allocation3 [shape = 'f32[64,128]{1,0:T(8,128)}', space=vmem, size = 0x8000, scoped, tag = 'scratch operand']
  %s0 = inlined_call_operand.vmem [shape: f32[64,64], index: 0, kind: input, shape index: {}]
  %s1 = inlined_call_operand.vmem [shape: f32[64,8], index: 1, kind: input, shape index: {}]
  %s2 = inlined_call_operand.vmem [shape: f32[8,128], index: 2, kind: input, shape index: {}]
  %s3 = inlined_call_operand.vmem [shape: f32[1,128], index: 3, kind: input, shape index: {}]
  %s4 = inlined_call_operand.hbm [shape: f32[128,128], index: 4, kind: input, shape index: {}]
  %s5 = inlined_call_operand.vmem [shape: f32[1,128], index: 5, kind: input, shape index: {}]
  %s6 = inlined_call_operand.hbm [shape: f32[128,384], index: 6, kind: input, shape index: {}]
  %s7 = inlined_call_operand.hbm [shape: f32[128,384], index: 7, kind: input, shape index: {}]
  %s8 = inlined_call_operand.vmem [shape: f32[1,384], index: 8, kind: input, shape index: {}]
  %s9 = inlined_call_operand.vmem [shape: f32[1,384], index: 9, kind: input, shape index: {}]
  %s10 = inlined_call_operand.hbm [shape: f32[128,128], index: 10, kind: input, shape index: {}]
  %s11 = inlined_call_operand.vmem [shape: f32[1,128], index: 11, kind: input, shape index: {}]
  %s12 = inlined_call_operand.hbm [shape: f32[64,128], index: 12, kind: output, shape index: {}]
  %s13 = sld [smem:[#allocation0]]
  $region74: #{tpu_custom_call.1} parent=0
    _
  %s15 = ssub.s32 1, %s13
  %s16 = scalar_select 0, %s15, %s13
  $region1: #{tpu_custom_call.1} parent=0
    #allocation4 [shape = 'u8[65536]{0}', space=vmem, size = 0x10000, scoped, tag = 'input window, operand 4, single buffered']
    #allocation5 [shape = 's32[1]{0}', space=sflag, size = 0x4, scoped, tag = 'scoped memory for tpu_custom_call.1']
    #allocation6 [shape = 's32[1]{0}', space=sflag, size = 0x4, scoped, tag = 'scoped memory for tpu_custom_call.1']
    #allocation7 [shape = 'u8[196608]{0}', space=vmem, size = 0x30000, scoped, tag = 'input window, operand 6, single buffered']
    #allocation8 [shape = 's32[1]{0}', space=sflag, size = 0x4, scoped, tag = 'scoped memory for tpu_custom_call.1']
    #allocation9 [shape = 'u8[196608]{0}', space=vmem, size = 0x30000, scoped, tag = 'input window, operand 7, single buffered']
    #allocation10 [shape = 'u8[65536]{0}', space=vmem, size = 0x10000, scoped, tag = 'input window, operand 10, single buffered']
    #allocation11 [shape = 's32[1]{0}', space=sflag, size = 0x4, scoped, tag = 'scoped memory for tpu_custom_call.1']
    #allocation12 [shape = 'u8[32768]{0}', space=vmem, size = 0x8000, scoped, tag = 'output window, operand 0, single buffered']
    %17 = vsyncpa [#allocation5], 0
    %18 = vsyncpa [#allocation8], 0
    %19 = vsyncpa [#allocation11], 0
    %20 = vsyncpa [#allocation6], 0
    // Predicated region
    $region2: #{tpu_custom_call.1} parent=1 // pred_check
      _
    $region3: #{tpu_custom_call.1} parent=1 // pred_check_branch
      %22 = sbr.rel (0) target = $region5
    $region4: #{tpu_custom_call.1} parent=1 // pred_region
      _
    $region5: #{tpu_custom_call.1} parent=1 // pred_fallthru
      _
    // Predicated region
    $region6: #{tpu_custom_call.1} parent=1 // pred_check
      _
    $region7: #{tpu_custom_call.1} parent=1 // pred_check_branch
      %24 = sbr.rel (0) target = $region9
    $region8: #{tpu_custom_call.1} parent=1 // pred_region
      _
    $region9: #{tpu_custom_call.1} parent=1 // pred_fallthru
      _
    // Predicated region
    $region10: #{tpu_custom_call.1} parent=1 // pred_check
      _
    $region11: #{tpu_custom_call.1} parent=1 // pred_check_branch
      %26 = sbr.rel (0) target = $region13
    $region12: #{tpu_custom_call.1} parent=1 // pred_region
      _
    $region13: #{tpu_custom_call.1} parent=1 // pred_fallthru
      _
    // Predicated region
    $region14: #{tpu_custom_call.1} parent=1 // pred_check
      _
    $region15: #{tpu_custom_call.1} parent=1 // pred_check_branch
      %28 = sbr.rel (0) target = $region17
    $region16: #{tpu_custom_call.1} parent=1 // pred_region
      _
    $region17: #{tpu_custom_call.1} parent=1 // pred_fallthru
      _
    // Predicated region
    $region18: #{tpu_custom_call.1} parent=1 // pred_check
      _
    $region19: #{tpu_custom_call.1} parent=1 // pred_check_branch
      %30 = sbr.rel (0) target = $region21
    $region20: #{tpu_custom_call.1} parent=1 // pred_region
      %s32 = ssub.s32 2048, 2048
      %33 = vsyncadd [#allocation5], %s32
      %s34 = sshll.u32 [#allocation4], 4
      %s35 = int_to_ptr.vmem [resolvable:$true] %s34
      %40 = dma.hbm_to_vmem [thread:$0]  %s4, 2048, %s35, [#allocation5], 128, 128, 8
    $region21: #{tpu_custom_call.1} parent=1 // pred_fallthru
      _
    // Predicated region
    $region22: #{tpu_custom_call.1} parent=1 // pred_check
      _
    $region23: #{tpu_custom_call.1} parent=1 // pred_check_branch
      %42 = sbr.rel (0) target = $region25
    $region24: #{tpu_custom_call.1} parent=1 // pred_region
      _
    $region25: #{tpu_custom_call.1} parent=1 // pred_fallthru
      _
    // Predicated region
    $region26: #{tpu_custom_call.1} parent=1 // pred_check
      _
    $region27: #{tpu_custom_call.1} parent=1 // pred_check_branch
      %44 = sbr.rel (0) target = $region29
    $region28: #{tpu_custom_call.1} parent=1 // pred_region
      %s46 = ssub.s32 6144, 6144
      %47 = vsyncadd [#allocation8], %s46
      %s48 = sshll.u32 [#allocation7], 4
      %s49 = int_to_ptr.vmem [resolvable:$true] %s48
      %54 = dma.hbm_to_vmem [thread:$0]  %s6, 6144, %s49, [#allocation8], 384, 384, 24
    $region29: #{tpu_custom_call.1} parent=1 // pred_fallthru
      _
    // Predicated region
    $region30: #{tpu_custom_call.1} parent=1 // pred_check
      _
    $region31: #{tpu_custom_call.1} parent=1 // pred_check_branch
      %56 = sbr.rel (0) target = $region33
    $region32: #{tpu_custom_call.1} parent=1 // pred_region
      %s58 = ssub.s32 6144, 6144
      %59 = vsyncadd [#allocation8], %s58
      %s60 = sshll.u32 [#allocation9], 4
      %s61 = int_to_ptr.vmem [resolvable:$true] %s60
      %66 = dma.hbm_to_vmem [thread:$0]  %s7, 6144, %s61, [#allocation8], 384, 384, 24
    $region33: #{tpu_custom_call.1} parent=1 // pred_fallthru
      _
    // Predicated region
    $region34: #{tpu_custom_call.1} parent=1 // pred_check
      _
    $region35: #{tpu_custom_call.1} parent=1 // pred_check_branch
      %68 = sbr.rel (0) target = $region37
    $region36: #{tpu_custom_call.1} parent=1 // pred_region
      _
    $region37: #{tpu_custom_call.1} parent=1 // pred_fallthru
      _
    // Predicated region
    $region38: #{tpu_custom_call.1} parent=1 // pred_check
      _
    $region39: #{tpu_custom_call.1} parent=1 // pred_check_branch
      %70 = sbr.rel (0) target = $region41
    $region40: #{tpu_custom_call.1} parent=1 // pred_region
      _
    $region41: #{tpu_custom_call.1} parent=1 // pred_fallthru
      _
    // Predicated region
    $region42: #{tpu_custom_call.1} parent=1 // pred_check
      _
    $region43: #{tpu_custom_call.1} parent=1 // pred_check_branch
      %72 = sbr.rel (0) target = $region45
    $region44: #{tpu_custom_call.1} parent=1 // pred_region
      %s74 = ssub.s32 2048, 2048
      %75 = vsyncadd [#allocation11], %s74
      %s76 = sshll.u32 [#allocation10], 4
      %s77 = int_to_ptr.vmem [resolvable:$true] %s76
      %82 = dma.hbm_to_vmem [thread:$0]  %s10, 2048, %s77, [#allocation11], 128, 128, 8
    $region45: #{tpu_custom_call.1} parent=1 // pred_fallthru
      _
    // Predicated region
    $region46: #{tpu_custom_call.1} parent=1 // pred_check
      _
    $region47: #{tpu_custom_call.1} parent=1 // pred_check_branch
      %84 = sbr.rel (0) target = $region49
    $region48: #{tpu_custom_call.1} parent=1 // pred_region
      _
    $region49: #{tpu_custom_call.1} parent=1 // pred_fallthru
      _
    // Predicated region
    $region50: #{tpu_custom_call.1} parent=1 // pred_check
      _
    $region51: #{tpu_custom_call.1} parent=1 // pred_check_branch
      %86 = sbr.rel (0) target = $region53
    $region52: #{tpu_custom_call.1} parent=1 // pred_region
      %87 = dma.done [#allocation5], 2048
    $region53: #{tpu_custom_call.1} parent=1 // pred_fallthru
      _
    // Predicated region
    $region54: #{tpu_custom_call.1} parent=1 // pred_check
      _
    $region55: #{tpu_custom_call.1} parent=1 // pred_check_branch
      %89 = sbr.rel (0) target = $region57
    $region56: #{tpu_custom_call.1} parent=1 // pred_region
      %90 = dma.done [#allocation8], 6144
    $region57: #{tpu_custom_call.1} parent=1 // pred_fallthru
      _
    // Predicated region
    $region58: #{tpu_custom_call.1} parent=1 // pred_check
      _
    $region59: #{tpu_custom_call.1} parent=1 // pred_check_branch
      %92 = sbr.rel (0) target = $region61
    $region60: #{tpu_custom_call.1} parent=1 // pred_region
      %93 = dma.done [#allocation8], 6144
    $region61: #{tpu_custom_call.1} parent=1 // pred_fallthru
      _
    // Predicated region
    $region62: #{tpu_custom_call.1} parent=1 // pred_check
      _
    $region63: #{tpu_custom_call.1} parent=1 // pred_check_branch
      %95 = sbr.rel (0) target = $region65
    $region64: #{tpu_custom_call.1} parent=1 // pred_region
      %96 = dma.done [#allocation11], 2048
    $region65: #{tpu_custom_call.1} parent=1 // pred_fallthru
      _
    %v97 = vld [vmem:[%s1] sm:$0xff]
    %v98 = vld [vmem:[%s1 + $0x8] sm:$0xff]
    %v99 = vld [vmem:[%s1 + $0x10] sm:$0xff]
    %v100 = vld [vmem:[%s1 + $0x18] sm:$0xff]
    %v101 = vld [vmem:[%s1 + $0x20] sm:$0xff]
    %v102 = vld [vmem:[%s1 + $0x28] sm:$0xff]
    %v103 = vld [vmem:[%s1 + $0x30] sm:$0xff]
    %v104 = vld [vmem:[%s1 + $0x38] sm:$0xff]
    %v105 = vld [vmem:[%s2] sm:$0xff]
    %vm106 = vcmask 64512
    %v108 = vsel %vm106, %v97, 0
    %v111 = vsel %vm106, %v98, 0
    %v114 = vsel %vm106, %v99, 0
    %v117 = vsel %vm106, %v100, 0
    %v120 = vsel %vm106, %v101, 0
    %v123 = vsel %vm106, %v102, 0
    %v126 = vsel %vm106, %v103, 0
    %v129 = vsel %vm106, %v104, 0
    %131 = vmatprep.subr.mxu0 0.0
    %132 = vmatpush1.msra.mxu0 %v105
    %133 = vmatprep.subr.mxu0 0.0
    %134 = vmatpush1.msra.mxu0 0.0
    %135 = vmatprep.subr.mxu0 0.0
    %136 = vmatpush1.msra.mxu0 0.0
    %137 = vmatprep.subr.mxu0 0.0
    %138 = vmatpush1.msra.mxu0 0.0
    %139 = vmatprep.subr.mxu0 0.0
    %140 = vmatpush1.msra.mxu0 0.0
    %141 = vmatprep.subr.mxu0 0.0
    %142 = vmatpush1.msra.mxu0 0.0
    %143 = vmatprep.subr.mxu0 0.0
    %144 = vmatpush1.msra.mxu0 0.0
    %145 = vmatprep.subr.mxu0 0.0
    %146 = vmatpush1.msra.mxu0 0.0
    %147 = vmatprep.subr.mxu0 0.0
    %148 = vmatpush1.msra.mxu0 0.0
    %149 = vmatprep.subr.mxu0 0.0
    %150 = vmatpush1.msra.mxu0 0.0
    %151 = vmatprep.subr.mxu0 0.0
    %152 = vmatpush1.msra.mxu0 0.0
    %153 = vmatprep.subr.mxu0 0.0
    %154 = vmatpush1.msra.mxu0 0.0
    %155 = vmatprep.subr.mxu0 0.0
    %156 = vmatpush1.msra.mxu0 0.0
    %157 = vmatprep.subr.mxu0 0.0
    %158 = vmatpush1.msra.mxu0 0.0
    %159 = vmatprep.subr.mxu0 0.0
    %160 = vmatpush1.msra.mxu0 0.0
    %161 = vmatprep.subr.mxu0 0.0
    %162 = vmatpush1.msra.mxu0 0.0
    %163 = vmatprep.subr.mxu0 0.0
    %164 = vmatpush1.msra.mxu0 0.0
    %165 = vmatprep.subr.mxu0 0.0
    %166 = vmatpush1.msra.mxu0 0.0
    %167 = vmatprep.subr.mxu0 0.0
    %168 = vmatpush1.msra.mxu0 0.0
    %169 = vmatprep.subr.mxu0 0.0
    %170 = vmatpush1.msra.mxu0 0.0
    %171 = vmatprep.subr.mxu0 0.0
    %172 = vmatpush1.msra.mxu0 0.0
    %173 = vmatprep.subr.mxu0 0.0
    %174 = vmatpush1.msra.mxu0 0.0
    %175 = vmatprep.subr.mxu0 0.0
    %176 = vmatpush1.msra.mxu0 0.0
    %177 = vmatprep.subr.mxu0 0.0
    %178 = vmatpush1.msra.mxu0 0.0
    %179 = vmatprep.subr.mxu0 0.0
    %180 = vmatpush1.msra.mxu0 0.0
    %181 = vmatprep.subr.mxu0 0.0
    %182 = vmatpush1.msra.mxu0 0.0
    %183 = vmatprep.subr.mxu0 0.0
    %184 = vmatpush1.msra.mxu0 0.0
    %185 = vmatprep.subr.mxu0 0.0
    %186 = vmatpush1.msra.mxu0 0.0
    %187 = vmatprep.subr.mxu0 0.0
    %188 = vmatpush1.msra.mxu0 0.0
    %189 = vmatprep.subr.mxu0 0.0
    %190 = vmatpush1.msra.mxu0 0.0
    %191 = vmatprep.subr.mxu0 0.0
    %192 = vmatpush1.msra.mxu0 0.0
    %193 = vmatprep.subr.mxu0 0.0
    %194 = vmatpush1.msra.mxu0 0.0
    %195 = vmatprep.mubr.f32.mxu0 0.0
    %196 = vmatmul.mubr.f32.gmra.mrb[0].mxu0 %v108
    %v197 = vpop.f32.mrb[0].mxu0
    %v198 = vadd.f32 0.0, %v197
    %v199 = vpop.f32.mrb[0].mxu0
    %200 = vmatprep.mubr.f32.mxu0 0.0
    %201 = vmatmul.mubr.f32.gmra.mrb[0].mxu0 %v111
    %v202 = vpop.f32.mrb[0].mxu0
    %v203 = vadd.f32 0.0, %v202
    %v204 = vpop.f32.mrb[0].mxu0
    %205 = vmatprep.mubr.f32.mxu0 0.0
    %206 = vmatmul.mubr.f32.gmra.mrb[0].mxu0 %v114
    %v207 = vpop.f32.mrb[0].mxu0
    %v208 = vadd.f32 0.0, %v207
    %v209 = vpop.f32.mrb[0].mxu0
    %210 = vmatprep.mubr.f32.mxu0 0.0
    %211 = vmatmul.mubr.f32.gmra.mrb[0].mxu0 %v117
    %v212 = vpop.f32.mrb[0].mxu0
    %v213 = vadd.f32 0.0, %v212
    %v214 = vpop.f32.mrb[0].mxu0
    %215 = vmatprep.mubr.f32.mxu0 0.0
    %216 = vmatmul.mubr.f32.gmra.mrb[0].mxu0 %v120
    %v217 = vpop.f32.mrb[0].mxu0
    %v218 = vadd.f32 0.0, %v217
    %v219 = vpop.f32.mrb[0].mxu0
    %220 = vmatprep.mubr.f32.mxu0 0.0
    %221 = vmatmul.mubr.f32.gmra.mrb[0].mxu0 %v123
    %v222 = vpop.f32.mrb[0].mxu0
    %v223 = vadd.f32 0.0, %v222
    %v224 = vpop.f32.mrb[0].mxu0
    %225 = vmatprep.mubr.f32.mxu0 0.0
    %226 = vmatmul.mubr.f32.gmra.mrb[0].mxu0 %v126
    %v227 = vpop.f32.mrb[0].mxu0
    %v228 = vadd.f32 0.0, %v227
    %v229 = vpop.f32.mrb[0].mxu0
    %230 = vmatprep.mubr.f32.mxu0 0.0
    %231 = vmatmul.mubr.f32.gmra.mrb[0].mxu0 %v129
    %v232 = vpop.f32.mrb[0].mxu0
    %v233 = vadd.f32 0.0, %v232
    %v234 = vpop.f32.mrb[0].mxu0
    %235 = vdwg.mxu0
    %v236 = vld [vmem:[%s0] sm:$0xff]
    %v237 = vld [vmem:[%s0 + $0x8] sm:$0xff]
    %v238 = vld [vmem:[%s0 + $0x10] sm:$0xff]
    %v239 = vld [vmem:[%s0 + $0x18] sm:$0xff]
    %v240 = vld [vmem:[%s0 + $0x20] sm:$0xff]
    %v241 = vld [vmem:[%s0 + $0x28] sm:$0xff]
    %v242 = vld [vmem:[%s0 + $0x30] sm:$0xff]
    %v243 = vld [vmem:[%s0 + $0x38] sm:$0xff]
    %v244 = vld [vmem:[%s3] sm:$0x1]
    %v246 = vlaneseq
    %v247 = vshrl.u32 %v246, 7
    %v248 = vsub.s32 0, %v247
    %v249 = vrot.slane %v244, %v248
    %vm251 = vcmask 523264
    %v253 = vsel %vm251, %v236, 0
    %v256 = vsel %vm251, %v237, 0
    %v259 = vsel %vm251, %v238, 0
    %v262 = vsel %vm251, %v239, 0
    %v265 = vsel %vm251, %v240, 0
    %v268 = vsel %vm251, %v241, 0
    %v271 = vsel %vm251, %v242, 0
    %v274 = vsel %vm251, %v243, 0
    %276 = vmatprep.subr.mxu0 0.0
    %277 = vmatpush1.msra.mxu0 %v198
    %278 = vmatprep.subr.mxu0 0.0
    %279 = vmatpush1.msra.mxu0 %v203
    %280 = vmatprep.subr.mxu0 0.0
    %281 = vmatpush1.msra.mxu0 %v208
    %282 = vmatprep.subr.mxu0 0.0
    %283 = vmatpush1.msra.mxu0 %v213
    %284 = vmatprep.subr.mxu0 0.0
    %285 = vmatpush1.msra.mxu0 %v218
    %286 = vmatprep.subr.mxu0 0.0
    %287 = vmatpush1.msra.mxu0 %v223
    %288 = vmatprep.subr.mxu0 0.0
    %289 = vmatpush1.msra.mxu0 %v228
    %290 = vmatprep.subr.mxu0 0.0
    %291 = vmatpush1.msra.mxu0 %v233
    %292 = vmatprep.subr.mxu0 0.0
    %293 = vmatpush1.msra.mxu0 0.0
    %294 = vmatprep.subr.mxu0 0.0
    %295 = vmatpush1.msra.mxu0 0.0
    %296 = vmatprep.subr.mxu0 0.0
    %297 = vmatpush1.msra.mxu0 0.0
    %298 = vmatprep.subr.mxu0 0.0
    %299 = vmatpush1.msra.mxu0 0.0
    %300 = vmatprep.subr.mxu0 0.0
    %301 = vmatpush1.msra.mxu0 0.0
    %302 = vmatprep.subr.mxu0 0.0
    %303 = vmatpush1.msra.mxu0 0.0
    %304 = vmatprep.subr.mxu0 0.0
    %305 = vmatpush1.msra.mxu0 0.0
    %306 = vmatprep.subr.mxu0 0.0
    %307 = vmatpush1.msra.mxu0 0.0
    %308 = vmatprep.subr.mxu0 0.0
    %309 = vmatpush1.msra.mxu0 0.0
    %310 = vmatprep.subr.mxu0 0.0
    %311 = vmatpush1.msra.mxu0 0.0
    %312 = vmatprep.subr.mxu0 0.0
    %313 = vmatpush1.msra.mxu0 0.0
    %314 = vmatprep.subr.mxu0 0.0
    %315 = vmatpush1.msra.mxu0 0.0
    %316 = vmatprep.subr.mxu0 0.0
    %317 = vmatpush1.msra.mxu0 0.0
    %318 = vmatprep.subr.mxu0 0.0
    %319 = vmatpush1.msra.mxu0 0.0
    %320 = vmatprep.subr.mxu0 0.0
    %321 = vmatpush1.msra.mxu0 0.0
    %322 = vmatprep.subr.mxu0 0.0
    %323 = vmatpush1.msra.mxu0 0.0
    %324 = vmatprep.subr.mxu0 0.0
    %325 = vmatpush1.msra.mxu0 0.0
    %326 = vmatprep.subr.mxu0 0.0
    %327 = vmatpush1.msra.mxu0 0.0
    %328 = vmatprep.subr.mxu0 0.0
    %329 = vmatpush1.msra.mxu0 0.0
    %330 = vmatprep.subr.mxu0 0.0
    %331 = vmatpush1.msra.mxu0 0.0
    %332 = vmatprep.subr.mxu0 0.0
    %333 = vmatpush1.msra.mxu0 0.0
    %334 = vmatprep.subr.mxu0 0.0
    %335 = vmatpush1.msra.mxu0 0.0
    %336 = vmatprep.subr.mxu0 0.0
    %337 = vmatpush1.msra.mxu0 0.0
    %338 = vmatprep.subr.mxu0 0.0
    %339 = vmatpush1.msra.mxu0 0.0
    %340 = vmatprep.mubr.f32.mxu0 0.0
    %341 = vmatmul.mubr.f32.gmra.mrb[0].mxu0 %v253
    %v342 = vpop.f32.mrb[0].mxu0
    %v343 = vadd.f32 %v249, %v342
    %v344 = vpop.f32.mrb[0].mxu0
    %345 = vmatprep.mubr.f32.mxu0 0.0
    %346 = vmatmul.mubr.f32.gmra.mrb[0].mxu0 %v256
    %v347 = vpop.f32.mrb[0].mxu0
    %v348 = vadd.f32 %v249, %v347
    %v349 = vpop.f32.mrb[0].mxu0
    %350 = vmatprep.mubr.f32.mxu0 0.0
    %351 = vmatmul.mubr.f32.gmra.mrb[0].mxu0 %v259
    %v352 = vpop.f32.mrb[0].mxu0
    %v353 = vadd.f32 %v249, %v352
    %v354 = vpop.f32.mrb[0].mxu0
    %355 = vmatprep.mubr.f32.mxu0 0.0
    %356 = vmatmul.mubr.f32.gmra.mrb[0].mxu0 %v262
    %v357 = vpop.f32.mrb[0].mxu0
    %v358 = vadd.f32 %v249, %v357
    %v359 = vpop.f32.mrb[0].mxu0
    %360 = vmatprep.mubr.f32.mxu0 0.0
    %361 = vmatmul.mubr.f32.gmra.mrb[0].mxu0 %v265
    %v362 = vpop.f32.mrb[0].mxu0
    %v363 = vadd.f32 %v249, %v362
    %v364 = vpop.f32.mrb[0].mxu0
    %365 = vmatprep.mubr.f32.mxu0 0.0
    %366 = vmatmul.mubr.f32.gmra.mrb[0].mxu0 %v268
    %v367 = vpop.f32.mrb[0].mxu0
    %v368 = vadd.f32 %v249, %v367
    %v369 = vpop.f32.mrb[0].mxu0
    %370 = vmatprep.mubr.f32.mxu0 0.0
    %371 = vmatmul.mubr.f32.gmra.mrb[0].mxu0 %v271
    %v372 = vpop.f32.mrb[0].mxu0
    %v373 = vadd.f32 %v249, %v372
    %v374 = vpop.f32.mrb[0].mxu0
    %375 = vmatprep.mubr.f32.mxu0 0.0
    %376 = vmatmul.mubr.f32.gmra.mrb[0].mxu0 %v274
    %v377 = vpop.f32.mrb[0].mxu0
    %v378 = vadd.f32 %v249, %v377
    %v379 = vpop.f32.mrb[0].mxu0
    %380 = vdwg.mxu0
    %v381 = vmax.f32 %v343, 0.0
    %v382 = vmax.f32 %v348, 0.0
    %v383 = vmax.f32 %v353, 0.0
    %v384 = vmax.f32 %v358, 0.0
    %v385 = vmax.f32 %v363, 0.0
    %v386 = vmax.f32 %v368, 0.0
    %v387 = vmax.f32 %v373, 0.0
    %v388 = vmax.f32 %v378, 0.0
    %v389 = vld [vmem:[#allocation4] sm:$0xff]
    %v390 = vld [vmem:[#allocation4 + $0x8] sm:$0xff]
    %v391 = vld [vmem:[#allocation4 + $0x10] sm:$0xff]
    %v392 = vld [vmem:[#allocation4 + $0x18] sm:$0xff]
    %v393 = vld [vmem:[#allocation4 + $0x20] sm:$0xff]
    %v394 = vld [vmem:[#allocation4 + $0x28] sm:$0xff]
    %v395 = vld [vmem:[#allocation4 + $0x30] sm:$0xff]
    %v396 = vld [vmem:[#allocation4 + $0x38] sm:$0xff]
    %v397 = vld [vmem:[#allocation4 + $0x40] sm:$0xff]
    %v398 = vld [vmem:[#allocation4 + $0x48] sm:$0xff]
    %v399 = vld [vmem:[#allocation4 + $0x50] sm:$0xff]
    %v400 = vld [vmem:[#allocation4 + $0x58] sm:$0xff]
    %v401 = vld [vmem:[#allocation4 + $0x60] sm:$0xff]
    %v402 = vld [vmem:[#allocation4 + $0x68] sm:$0xff]
    %v403 = vld [vmem:[#allocation4 + $0x70] sm:$0xff]
    %v404 = vld [vmem:[#allocation4 + $0x78] sm:$0xff]
    %405 = vmatprep.subr.mxu0 0.0
    %406 = vmatpush1.msra.mxu0 %v389
    %407 = vmatprep.subr.mxu0 0.0
    %408 = vmatpush1.msra.mxu0 %v390
    %409 = vmatprep.subr.mxu0 0.0
    %410 = vmatpush1.msra.mxu0 %v391
    %411 = vmatprep.subr.mxu0 0.0
    %412 = vmatpush1.msra.mxu0 %v392
    %413 = vmatprep.subr.mxu0 0.0
    %414 = vmatpush1.msra.mxu0 %v393
    %415 = vmatprep.subr.mxu0 0.0
    %416 = vmatpush1.msra.mxu0 %v394
    %417 = vmatprep.subr.mxu0 0.0
    %418 = vmatpush1.msra.mxu0 %v395
    %419 = vmatprep.subr.mxu0 0.0
    %420 = vmatpush1.msra.mxu0 %v396
    %421 = vmatprep.subr.mxu0 0.0
    %422 = vmatpush1.msra.mxu0 %v397
    %423 = vmatprep.subr.mxu0 0.0
    %424 = vmatpush1.msra.mxu0 %v398
    %425 = vmatprep.subr.mxu0 0.0
    %426 = vmatpush1.msra.mxu0 %v399
    %427 = vmatprep.subr.mxu0 0.0
    %428 = vmatpush1.msra.mxu0 %v400
    %429 = vmatprep.subr.mxu0 0.0
    %430 = vmatpush1.msra.mxu0 %v401
    %431 = vmatprep.subr.mxu0 0.0
    %432 = vmatpush1.msra.mxu0 %v402
    %433 = vmatprep.subr.mxu0 0.0
    %434 = vmatpush1.msra.mxu0 %v403
    %435 = vmatprep.subr.mxu0 0.0
    %436 = vmatpush1.msra.mxu0 %v404
    %437 = vmatprep.subr.mxu0 0.0
    %438 = vmatpush1.msra.mxu0 0.0
    %439 = vmatprep.subr.mxu0 0.0
    %440 = vmatpush1.msra.mxu0 0.0
    %441 = vmatprep.subr.mxu0 0.0
    %442 = vmatpush1.msra.mxu0 0.0
    %443 = vmatprep.subr.mxu0 0.0
    %444 = vmatpush1.msra.mxu0 0.0
    %445 = vmatprep.subr.mxu0 0.0
    %446 = vmatpush1.msra.mxu0 0.0
    %447 = vmatprep.subr.mxu0 0.0
    %448 = vmatpush1.msra.mxu0 0.0
    %449 = vmatprep.subr.mxu0 0.0
    %450 = vmatpush1.msra.mxu0 0.0
    %451 = vmatprep.subr.mxu0 0.0
    %452 = vmatpush1.msra.mxu0 0.0
    %453 = vmatprep.subr.mxu0 0.0
    %454 = vmatpush1.msra.mxu0 0.0
    %455 = vmatprep.subr.mxu0 0.0
    %456 = vmatpush1.msra.mxu0 0.0
    %457 = vmatprep.subr.mxu0 0.0
    %458 = vmatpush1.msra.mxu0 0.0
    %459 = vmatprep.subr.mxu0 0.0
    %460 = vmatpush1.msra.mxu0 0.0
    %461 = vmatprep.subr.mxu0 0.0
    %462 = vmatpush1.msra.mxu0 0.0
    %463 = vmatprep.subr.mxu0 0.0
    %464 = vmatpush1.msra.mxu0 0.0
    %465 = vmatprep.subr.mxu0 0.0
    %466 = vmatpush1.msra.mxu0 0.0
    %467 = vmatprep.subr.mxu0 0.0
    %468 = vmatpush1.msra.mxu0 0.0
    %469 = vmatprep.mubr.f32.mxu0 0.0
    %470 = vmatmul.mubr.f32.gmra.mrb[0].mxu0 %v381
    %v471 = vpop.f32.mrb[0].mxu0
    %v472 = vadd.f32 0.0, %v471
    %v473 = vpop.f32.mrb[0].mxu0
    %474 = vmatprep.mubr.f32.mxu0 0.0
    %475 = vmatmul.mubr.f32.gmra.mrb[0].mxu0 %v382
    %v476 = vpop.f32.mrb[0].mxu0
    %v477 = vadd.f32 0.0, %v476
    %v478 = vpop.f32.mrb[0].mxu0
    %479 = vmatprep.mubr.f32.mxu0 0.0
    %480 = vmatmul.mubr.f32.gmra.mrb[0].mxu0 %v383
    %v481 = vpop.f32.mrb[0].mxu0
    %v482 = vadd.f32 0.0, %v481
    %v483 = vpop.f32.mrb[0].mxu0
    %484 = vmatprep.mubr.f32.mxu0 0.0
    %485 = vmatmul.mubr.f32.gmra.mrb[0].mxu0 %v384
    %v486 = vpop.f32.mrb[0].mxu0
    %v487 = vadd.f32 0.0, %v486
    %v488 = vpop.f32.mrb[0].mxu0
    %489 = vmatprep.mubr.f32.mxu0 0.0
    %490 = vmatmul.mubr.f32.gmra.mrb[0].mxu0 %v385
    %v491 = vpop.f32.mrb[0].mxu0
    %v492 = vadd.f32 0.0, %v491
    %v493 = vpop.f32.mrb[0].mxu0
    %494 = vmatprep.mubr.f32.mxu0 0.0
    %495 = vmatmul.mubr.f32.gmra.mrb[0].mxu0 %v386
    %v496 = vpop.f32.mrb[0].mxu0
    %v497 = vadd.f32 0.0, %v496
    %v498 = vpop.f32.mrb[0].mxu0
    %499 = vmatprep.mubr.f32.mxu0 0.0
    %500 = vmatmul.mubr.f32.gmra.mrb[0].mxu0 %v387
    %v501 = vpop.f32.mrb[0].mxu0
    %v502 = vadd.f32 0.0, %v501
    %v503 = vpop.f32.mrb[0].mxu0
    %504 = vmatprep.mubr.f32.mxu0 0.0
    %505 = vmatmul.mubr.f32.gmra.mrb[0].mxu0 %v388
    %v506 = vpop.f32.mrb[0].mxu0
    %v507 = vadd.f32 0.0, %v506
    %v508 = vpop.f32.mrb[0].mxu0
    %509 = vdwg.mxu0
    %v510 = vld [vmem:[%s5] sm:$0x1]
    %v512 = vlaneseq
    %v513 = vshrl.u32 %v512, 7
    %v514 = vsub.s32 0, %v513
    %v515 = vrot.slane %v510, %v514
    %517 = vmatprep.subr.mxu0 0.0
    %518 = vmatpush1.msra.mxu0 %v472
    %519 = vmatprep.subr.mxu0 0.0
    %520 = vmatpush1.msra.mxu0 %v477
    %521 = vmatprep.subr.mxu0 0.0
    %522 = vmatpush1.msra.mxu0 %v482
    %523 = vmatprep.subr.mxu0 0.0
    %524 = vmatpush1.msra.mxu0 %v487
    %525 = vmatprep.subr.mxu0 0.0
    %526 = vmatpush1.msra.mxu0 %v492
    %527 = vmatprep.subr.mxu0 0.0
    %528 = vmatpush1.msra.mxu0 %v497
    %529 = vmatprep.subr.mxu0 0.0
    %530 = vmatpush1.msra.mxu0 %v502
    %531 = vmatprep.subr.mxu0 0.0
    %532 = vmatpush1.msra.mxu0 %v507
    %533 = vmatprep.subr.mxu0 0.0
    %534 = vmatpush1.msra.mxu0 0.0
    %535 = vmatprep.subr.mxu0 0.0
    %536 = vmatpush1.msra.mxu0 0.0
    %537 = vmatprep.subr.mxu0 0.0
    %538 = vmatpush1.msra.mxu0 0.0
    %539 = vmatprep.subr.mxu0 0.0
    %540 = vmatpush1.msra.mxu0 0.0
    %541 = vmatprep.subr.mxu0 0.0
    %542 = vmatpush1.msra.mxu0 0.0
    %543 = vmatprep.subr.mxu0 0.0
    %544 = vmatpush1.msra.mxu0 0.0
    %545 = vmatprep.subr.mxu0 0.0
    %546 = vmatpush1.msra.mxu0 0.0
    %547 = vmatprep.subr.mxu0 0.0
    %548 = vmatpush1.msra.mxu0 0.0
    %549 = vmatprep.subr.mxu0 0.0
    %550 = vmatpush1.msra.mxu0 0.0
    %551 = vmatprep.subr.mxu0 0.0
    %552 = vmatpush1.msra.mxu0 0.0
    %553 = vmatprep.subr.mxu0 0.0
    %554 = vmatpush1.msra.mxu0 0.0
    %555 = vmatprep.subr.mxu0 0.0
    %556 = vmatpush1.msra.mxu0 0.0
    %557 = vmatprep.subr.mxu0 0.0
    %558 = vmatpush1.msra.mxu0 0.0
    %559 = vmatprep.subr.mxu0 0.0
    %560 = vmatpush1.msra.mxu0 0.0
    %561 = vmatprep.subr.mxu0 0.0
    %562 = vmatpush1.msra.mxu0 0.0
    %563 = vmatprep.subr.mxu0 0.0
    %564 = vmatpush1.msra.mxu0 0.0
    %565 = vmatprep.subr.mxu0 0.0
    %566 = vmatpush1.msra.mxu0 0.0
    %567 = vmatprep.subr.mxu0 0.0
    %568 = vmatpush1.msra.mxu0 0.0
    %569 = vmatprep.subr.mxu0 0.0
    %570 = vmatpush1.msra.mxu0 0.0
    %571 = vmatprep.subr.mxu0 0.0
    %572 = vmatpush1.msra.mxu0 0.0
    %573 = vmatprep.subr.mxu0 0.0
    %574 = vmatpush1.msra.mxu0 0.0
    %575 = vmatprep.subr.mxu0 0.0
    %576 = vmatpush1.msra.mxu0 0.0
    %577 = vmatprep.subr.mxu0 0.0
    %578 = vmatpush1.msra.mxu0 0.0
    %579 = vmatprep.subr.mxu0 0.0
    %580 = vmatpush1.msra.mxu0 0.0
    %581 = vmatprep.mubr.f32.mxu0 0.0
    %582 = vmatmul.mubr.f32.gmra.mrb[0].mxu0 %v253
    %v583 = vpop.f32.mrb[0].mxu0
    %v584 = vadd.f32 %v515, %v583
    %v585 = vpop.f32.mrb[0].mxu0
    %586 = vmatprep.mubr.f32.mxu0 0.0
    %587 = vmatmul.mubr.f32.gmra.mrb[0].mxu0 %v256
    %v588 = vpop.f32.mrb[0].mxu0
    %v589 = vadd.f32 %v515, %v588
    %v590 = vpop.f32.mrb[0].mxu0
    %591 = vmatprep.mubr.f32.mxu0 0.0
    %592 = vmatmul.mubr.f32.gmra.mrb[0].mxu0 %v259
    %v593 = vpop.f32.mrb[0].mxu0
    %v594 = vadd.f32 %v515, %v593
    %v595 = vpop.f32.mrb[0].mxu0
    %596 = vmatprep.mubr.f32.mxu0 0.0
    %597 = vmatmul.mubr.f32.gmra.mrb[0].mxu0 %v262
    %v598 = vpop.f32.mrb[0].mxu0
    %v599 = vadd.f32 %v515, %v598
    %v600 = vpop.f32.mrb[0].mxu0
    %601 = vmatprep.mubr.f32.mxu0 0.0
    %602 = vmatmul.mubr.f32.gmra.mrb[0].mxu0 %v265
    %v603 = vpop.f32.mrb[0].mxu0
    %v604 = vadd.f32 %v515, %v603
    %v605 = vpop.f32.mrb[0].mxu0
    %606 = vmatprep.mubr.f32.mxu0 0.0
    %607 = vmatmul.mubr.f32.gmra.mrb[0].mxu0 %v268
    %v608 = vpop.f32.mrb[0].mxu0
    %v609 = vadd.f32 %v515, %v608
    %v610 = vpop.f32.mrb[0].mxu0
    %611 = vmatprep.mubr.f32.mxu0 0.0
    %612 = vmatmul.mubr.f32.gmra.mrb[0].mxu0 %v271
    %v613 = vpop.f32.mrb[0].mxu0
    %v614 = vadd.f32 %v515, %v613
    %v615 = vpop.f32.mrb[0].mxu0
    %616 = vmatprep.mubr.f32.mxu0 0.0
    %617 = vmatmul.mubr.f32.gmra.mrb[0].mxu0 %v274
    %v618 = vpop.f32.mrb[0].mxu0
    %v619 = vadd.f32 %v515, %v618
    %v620 = vpop.f32.mrb[0].mxu0
    %621 = vdwg.mxu0
    %v622 = vtanh.pop %v584
    %v623 = vtanh.pop %v589
    %v624 = vtanh.pop %v594
    %v625 = vtanh.pop %v599
    %v626 = vtanh.pop %v604
    %v627 = vtanh.pop %v609
    %v628 = vtanh.pop %v614
    %v629 = vtanh.pop %v619
    %v630 = vld [vmem:[#allocation7] sm:$0xff]
    %v631 = vld [vmem:[#allocation7 + $0x8] sm:$0xff]
    %v632 = vld [vmem:[#allocation7 + $0x10] sm:$0xff]
    %v633 = vld [vmem:[#allocation7 + $0x18] sm:$0xff]
    %v634 = vld [vmem:[#allocation7 + $0x20] sm:$0xff]
    %v635 = vld [vmem:[#allocation7 + $0x28] sm:$0xff]
    %v636 = vld [vmem:[#allocation7 + $0x30] sm:$0xff]
    %v637 = vld [vmem:[#allocation7 + $0x38] sm:$0xff]
    %v638 = vld [vmem:[#allocation7 + $0x40] sm:$0xff]
    %v639 = vld [vmem:[#allocation7 + $0x48] sm:$0xff]
    %v640 = vld [vmem:[#allocation7 + $0x50] sm:$0xff]
    %v641 = vld [vmem:[#allocation7 + $0x58] sm:$0xff]
    %v642 = vld [vmem:[#allocation7 + $0x60] sm:$0xff]
    %v643 = vld [vmem:[#allocation7 + $0x68] sm:$0xff]
    %v644 = vld [vmem:[#allocation7 + $0x70] sm:$0xff]
    %v645 = vld [vmem:[#allocation7 + $0x78] sm:$0xff]
    %v646 = vld [vmem:[#allocation7 + $0x80] sm:$0xff]
    %v647 = vld [vmem:[#allocation7 + $0x88] sm:$0xff]
    %v648 = vld [vmem:[#allocation7 + $0x90] sm:$0xff]
    %v649 = vld [vmem:[#allocation7 + $0x98] sm:$0xff]
    %v650 = vld [vmem:[#allocation7 + $0xa0] sm:$0xff]
    %v651 = vld [vmem:[#allocation7 + $0xa8] sm:$0xff]
    %v652 = vld [vmem:[#allocation7 + $0xb0] sm:$0xff]
    %v653 = vld [vmem:[#allocation7 + $0xb8] sm:$0xff]
    %v654 = vld [vmem:[#allocation7 + $0xc0] sm:$0xff]
    %v655 = vld [vmem:[#allocation7 + $0xc8] sm:$0xff]
    %v656 = vld [vmem:[#allocation7 + $0xd0] sm:$0xff]
    %v657 = vld [vmem:[#allocation7 + $0xd8] sm:$0xff]
    %v658 = vld [vmem:[#allocation7 + $0xe0] sm:$0xff]
    %v659 = vld [vmem:[#allocation7 + $0xe8] sm:$0xff]
    %v660 = vld [vmem:[#allocation7 + $0xf0] sm:$0xff]
    %v661 = vld [vmem:[#allocation7 + $0xf8] sm:$0xff]
    %v662 = vld [vmem:[#allocation7 + $0x100] sm:$0xff]
    %v663 = vld [vmem:[#allocation7 + $0x108] sm:$0xff]
    %v664 = vld [vmem:[#allocation7 + $0x110] sm:$0xff]
    %v665 = vld [vmem:[#allocation7 + $0x118] sm:$0xff]
    %v666 = vld [vmem:[#allocation7 + $0x120] sm:$0xff]
    %v667 = vld [vmem:[#allocation7 + $0x128] sm:$0xff]
    %v668 = vld [vmem:[#allocation7 + $0x130] sm:$0xff]
    %v669 = vld [vmem:[#allocation7 + $0x138] sm:$0xff]
    %v670 = vld [vmem:[#allocation7 + $0x140] sm:$0xff]
    %v671 = vld [vmem:[#allocation7 + $0x148] sm:$0xff]
    %v672 = vld [vmem:[#allocation7 + $0x150] sm:$0xff]
    %v673 = vld [vmem:[#allocation7 + $0x158] sm:$0xff]
    %v674 = vld [vmem:[#allocation7 + $0x160] sm:$0xff]
    %v675 = vld [vmem:[#allocation7 + $0x168] sm:$0xff]
    %v676 = vld [vmem:[#allocation7 + $0x170] sm:$0xff]
    %v677 = vld [vmem:[#allocation7 + $0x178] sm:$0xff]
    %v678 = vld [vmem:[%s8] sm:$0x7]
    %v680 = vlaneseq
    %v681 = vshrl.u32 %v680, 7
    %v682 = vsub.s32 0, %v681
    %v683 = vrot.slane %v678, %v682
    %v684 = vlaneseq
    %v685 = vshrl.u32 %v684, 7
    %v686 = vsub.s32 1, %v685
    %v687 = vrot.slane %v678, %v686
    %v688 = vlaneseq
    %v689 = vshrl.u32 %v688, 7
    %v690 = vsub.s32 2, %v689
    %v691 = vrot.slane %v678, %v690
    %695 = vmatprep.subr.mxu0 %v631
    %696 = vmatpush1.msra.mxu0 %v630
    %697 = vmatprep.subr.mxu0 %v634
    %698 = vmatpush1.msra.mxu0 %v633
    %699 = vmatprep.subr.mxu0 %v637
    %700 = vmatpush1.msra.mxu0 %v636
    %701 = vmatprep.subr.mxu0 %v640
    %702 = vmatpush1.msra.mxu0 %v639
    %703 = vmatprep.subr.mxu0 %v643
    %704 = vmatpush1.msra.mxu0 %v642
    %705 = vmatprep.subr.mxu0 %v646
    %706 = vmatpush1.msra.mxu0 %v645
    %707 = vmatprep.subr.mxu0 %v649
    %708 = vmatpush1.msra.mxu0 %v648
    %709 = vmatprep.subr.mxu0 %v652
    %710 = vmatpush1.msra.mxu0 %v651
    %711 = vmatprep.subr.mxu0 %v655
    %712 = vmatpush1.msra.mxu0 %v654
    %713 = vmatprep.subr.mxu0 %v658
    %714 = vmatpush1.msra.mxu0 %v657
    %715 = vmatprep.subr.mxu0 %v661
    %716 = vmatpush1.msra.mxu0 %v660
    %717 = vmatprep.subr.mxu0 %v664
    %718 = vmatpush1.msra.mxu0 %v663
    %719 = vmatprep.subr.mxu0 %v667
    %720 = vmatpush1.msra.mxu0 %v666
    %721 = vmatprep.subr.mxu0 %v670
    %722 = vmatpush1.msra.mxu0 %v669
    %723 = vmatprep.subr.mxu0 %v673
    %724 = vmatpush1.msra.mxu0 %v672
    %725 = vmatprep.subr.mxu0 %v676
    %726 = vmatpush1.msra.mxu0 %v675
    %727 = vmatprep.subr.mxu0 0.0
    %728 = vmatpush1.msra.mxu0 0.0
    %729 = vmatprep.subr.mxu0 0.0
    %730 = vmatpush1.msra.mxu0 0.0
    %731 = vmatprep.subr.mxu0 0.0
    %732 = vmatpush1.msra.mxu0 0.0
    %733 = vmatprep.subr.mxu0 0.0
    %734 = vmatpush1.msra.mxu0 0.0
    %735 = vmatprep.subr.mxu0 0.0
    %736 = vmatpush1.msra.mxu0 0.0
    %737 = vmatprep.subr.mxu0 0.0
    %738 = vmatpush1.msra.mxu0 0.0
    %739 = vmatprep.subr.mxu0 0.0
    %740 = vmatpush1.msra.mxu0 0.0
    %741 = vmatprep.subr.mxu0 0.0
    %742 = vmatpush1.msra.mxu0 0.0
    %743 = vmatprep.subr.mxu0 0.0
    %744 = vmatpush1.msra.mxu0 0.0
    %745 = vmatprep.subr.mxu0 0.0
    %746 = vmatpush1.msra.mxu0 0.0
    %747 = vmatprep.subr.mxu0 0.0
    %748 = vmatpush1.msra.mxu0 0.0
    %749 = vmatprep.subr.mxu0 0.0
    %750 = vmatpush1.msra.mxu0 0.0
    %751 = vmatprep.subr.mxu0 0.0
    %752 = vmatpush1.msra.mxu0 0.0
    %753 = vmatprep.subr.mxu0 0.0
    %754 = vmatpush1.msra.mxu0 0.0
    %755 = vmatprep.subr.mxu0 0.0
    %756 = vmatpush1.msra.mxu0 0.0
    %757 = vmatprep.subr.mxu0 0.0
    %758 = vmatpush1.msra.mxu0 0.0
    %759 = vmatprep.mubr.f32.mxu0 0.0
    %760 = vmatmul.mubr.f32.gmra.mrb[0].mxu0 %v622
    %v761 = vpop.f32.mrb[0].mxu0
    %v762 = vadd.f32 %v683, %v761
    %v763 = vpop.f32.mrb[0].mxu0
    %v764 = vadd.f32 %v687, %v763
    %765 = vmatprep.mubr.f32.mxu0 0.0
    %766 = vmatmul.mubr.f32.gmra.mrb[0].mxu0 %v623
    %v767 = vpop.f32.mrb[0].mxu0
    %v768 = vadd.f32 %v683, %v767
    %v769 = vpop.f32.mrb[0].mxu0
    %v770 = vadd.f32 %v687, %v769
    %771 = vmatprep.mubr.f32.mxu0 0.0
    %772 = vmatmul.mubr.f32.gmra.mrb[0].mxu0 %v624
    %v773 = vpop.f32.mrb[0].mxu0
    %v774 = vadd.f32 %v683, %v773
    %v775 = vpop.f32.mrb[0].mxu0
    %v776 = vadd.f32 %v687, %v775
    %777 = vmatprep.mubr.f32.mxu0 0.0
    %778 = vmatmul.mubr.f32.gmra.mrb[0].mxu0 %v625
    %v779 = vpop.f32.mrb[0].mxu0
    %v780 = vadd.f32 %v683, %v779
    %v781 = vpop.f32.mrb[0].mxu0
    %v782 = vadd.f32 %v687, %v781
    %783 = vmatprep.mubr.f32.mxu0 0.0
    %784 = vmatmul.mubr.f32.gmra.mrb[0].mxu0 %v626
    %v785 = vpop.f32.mrb[0].mxu0
    %v786 = vadd.f32 %v683, %v785
    %v787 = vpop.f32.mrb[0].mxu0
    %v788 = vadd.f32 %v687, %v787
    %789 = vmatprep.mubr.f32.mxu0 0.0
    %790 = vmatmul.mubr.f32.gmra.mrb[0].mxu0 %v627
    %v791 = vpop.f32.mrb[0].mxu0
    %v792 = vadd.f32 %v683, %v791
    %v793 = vpop.f32.mrb[0].mxu0
    %v794 = vadd.f32 %v687, %v793
    %795 = vmatprep.mubr.f32.mxu0 0.0
    %796 = vmatmul.mubr.f32.gmra.mrb[0].mxu0 %v628
    %v797 = vpop.f32.mrb[0].mxu0
    %v798 = vadd.f32 %v683, %v797
    %v799 = vpop.f32.mrb[0].mxu0
    %v800 = vadd.f32 %v687, %v799
    %801 = vmatprep.mubr.f32.mxu0 0.0
    %802 = vmatmul.mubr.f32.gmra.mrb[0].mxu0 %v629
    %v803 = vpop.f32.mrb[0].mxu0
    %v804 = vadd.f32 %v683, %v803
    %v805 = vpop.f32.mrb[0].mxu0
    %v806 = vadd.f32 %v687, %v805
    %807 = vdwg.mxu0
    %808 = vmatprep.subr.mxu0 0.0
    %809 = vmatpush1.msra.mxu0 %v632
    %810 = vmatprep.subr.mxu0 0.0
    %811 = vmatpush1.msra.mxu0 %v635
    %812 = vmatprep.subr.mxu0 0.0
    %813 = vmatpush1.msra.mxu0 %v638
    %814 = vmatprep.subr.mxu0 0.0
    %815 = vmatpush1.msra.mxu0 %v641
    %816 = vmatprep.subr.mxu0 0.0
    %817 = vmatpush1.msra.mxu0 %v644
    %818 = vmatprep.subr.mxu0 0.0
    %819 = vmatpush1.msra.mxu0 %v647
    %820 = vmatprep.subr.mxu0 0.0
    %821 = vmatpush1.msra.mxu0 %v650
    %822 = vmatprep.subr.mxu0 0.0
    %823 = vmatpush1.msra.mxu0 %v653
    %824 = vmatprep.subr.mxu0 0.0
    %825 = vmatpush1.msra.mxu0 %v656
    %826 = vmatprep.subr.mxu0 0.0
    %827 = vmatpush1.msra.mxu0 %v659
    %828 = vmatprep.subr.mxu0 0.0
    %829 = vmatpush1.msra.mxu0 %v662
    %830 = vmatprep.subr.mxu0 0.0
    %831 = vmatpush1.msra.mxu0 %v665
    %832 = vmatprep.subr.mxu0 0.0
    %833 = vmatpush1.msra.mxu0 %v668
    %834 = vmatprep.subr.mxu0 0.0
    %835 = vmatpush1.msra.mxu0 %v671
    %836 = vmatprep.subr.mxu0 0.0
    %837 = vmatpush1.msra.mxu0 %v674
    %838 = vmatprep.subr.mxu0 0.0
    %839 = vmatpush1.msra.mxu0 %v677
    %840 = vmatprep.subr.mxu0 0.0
    %841 = vmatpush1.msra.mxu0 0.0
    %842 = vmatprep.subr.mxu0 0.0
    %843 = vmatpush1.msra.mxu0 0.0
    %844 = vmatprep.subr.mxu0 0.0
    %845 = vmatpush1.msra.mxu0 0.0
    %846 = vmatprep.subr.mxu0 0.0
    %847 = vmatpush1.msra.mxu0 0.0
    %848 = vmatprep.subr.mxu0 0.0
    %849 = vmatpush1.msra.mxu0 0.0
    %850 = vmatprep.subr.mxu0 0.0
    %851 = vmatpush1.msra.mxu0 0.0
    %852 = vmatprep.subr.mxu0 0.0
    %853 = vmatpush1.msra.mxu0 0.0
    %854 = vmatprep.subr.mxu0 0.0
    %855 = vmatpush1.msra.mxu0 0.0
    %856 = vmatprep.subr.mxu0 0.0
    %857 = vmatpush1.msra.mxu0 0.0
    %858 = vmatprep.subr.mxu0 0.0
    %859 = vmatpush1.msra.mxu0 0.0
    %860 = vmatprep.subr.mxu0 0.0
    %861 = vmatpush1.msra.mxu0 0.0
    %862 = vmatprep.subr.mxu0 0.0
    %863 = vmatpush1.msra.mxu0 0.0
    %864 = vmatprep.subr.mxu0 0.0
    %865 = vmatpush1.msra.mxu0 0.0
    %866 = vmatprep.subr.mxu0 0.0
    %867 = vmatpush1.msra.mxu0 0.0
    %868 = vmatprep.subr.mxu0 0.0
    %869 = vmatpush1.msra.mxu0 0.0
    %870 = vmatprep.subr.mxu0 0.0
    %871 = vmatpush1.msra.mxu0 0.0
    %872 = vmatprep.mubr.f32.mxu0 0.0
    %873 = vmatmul.mubr.f32.gmra.mrb[0].mxu0 %v622
    %v874 = vpop.f32.mrb[0].mxu0
    %v875 = vadd.f32 %v691, %v874
    %v876 = vpop.f32.mrb[0].mxu0
    %877 = vmatprep.mubr.f32.mxu0 0.0
    %878 = vmatmul.mubr.f32.gmra.mrb[0].mxu0 %v623
    %v879 = vpop.f32.mrb[0].mxu0
    %v880 = vadd.f32 %v691, %v879
    %v881 = vpop.f32.mrb[0].mxu0
    %882 = vmatprep.mubr.f32.mxu0 0.0
    %883 = vmatmul.mubr.f32.gmra.mrb[0].mxu0 %v624
    %v884 = vpop.f32.mrb[0].mxu0
    %v885 = vadd.f32 %v691, %v884
    %v886 = vpop.f32.mrb[0].mxu0
    %887 = vmatprep.mubr.f32.mxu0 0.0
    %888 = vmatmul.mubr.f32.gmra.mrb[0].mxu0 %v625
    %v889 = vpop.f32.mrb[0].mxu0
    %v890 = vadd.f32 %v691, %v889
    %v891 = vpop.f32.mrb[0].mxu0
    %892 = vmatprep.mubr.f32.mxu0 0.0
    %893 = vmatmul.mubr.f32.gmra.mrb[0].mxu0 %v626
    %v894 = vpop.f32.mrb[0].mxu0
    %v895 = vadd.f32 %v691, %v894
    %v896 = vpop.f32.mrb[0].mxu0
    %897 = vmatprep.mubr.f32.mxu0 0.0
    %898 = vmatmul.mubr.f32.gmra.mrb[0].mxu0 %v627
    %v899 = vpop.f32.mrb[0].mxu0
    %v900 = vadd.f32 %v691, %v899
    %v901 = vpop.f32.mrb[0].mxu0
    %902 = vmatprep.mubr.f32.mxu0 0.0
    %903 = vmatmul.mubr.f32.gmra.mrb[0].mxu0 %v628
    %v904 = vpop.f32.mrb[0].mxu0
    %v905 = vadd.f32 %v691, %v904
    %v906 = vpop.f32.mrb[0].mxu0
    %907 = vmatprep.mubr.f32.mxu0 0.0
    %908 = vmatmul.mubr.f32.gmra.mrb[0].mxu0 %v629
    %v909 = vpop.f32.mrb[0].mxu0
    %v910 = vadd.f32 %v691, %v909
    %v911 = vpop.f32.mrb[0].mxu0
    %912 = vdwg.mxu0
    %913 = vst [vmem:[#allocation2] sm:$0xff] %v762
    %914 = vst [vmem:[#allocation2 + $0x8] sm:$0xff] %v764
    %915 = vst [vmem:[#allocation2 + $0x10] sm:$0xff] %v875
    %916 = vst [vmem:[#allocation2 + $0x18] sm:$0xff] %v768
    %917 = vst [vmem:[#allocation2 + $0x20] sm:$0xff] %v770
    %918 = vst [vmem:[#allocation2 + $0x28] sm:$0xff] %v880
    %919 = vst [vmem:[#allocation2 + $0x30] sm:$0xff] %v774
    %920 = vst [vmem:[#allocation2 + $0x38] sm:$0xff] %v776
    %921 = vst [vmem:[#allocation2 + $0x40] sm:$0xff] %v885
    %922 = vst [vmem:[#allocation2 + $0x48] sm:$0xff] %v780
    %923 = vst [vmem:[#allocation2 + $0x50] sm:$0xff] %v782
    %924 = vst [vmem:[#allocation2 + $0x58] sm:$0xff] %v890
    %925 = vst [vmem:[#allocation2 + $0x60] sm:$0xff] %v786
    %926 = vst [vmem:[#allocation2 + $0x68] sm:$0xff] %v788
    %927 = vst [vmem:[#allocation2 + $0x70] sm:$0xff] %v895
    %928 = vst [vmem:[#allocation2 + $0x78] sm:$0xff] %v792
    %929 = vst [vmem:[#allocation2 + $0x80] sm:$0xff] %v794
    %930 = vst [vmem:[#allocation2 + $0x88] sm:$0xff] %v900
    %931 = vst [vmem:[#allocation2 + $0x90] sm:$0xff] %v798
    %932 = vst [vmem:[#allocation2 + $0x98] sm:$0xff] %v800
    %933 = vst [vmem:[#allocation2 + $0xa0] sm:$0xff] %v905
    %934 = vst [vmem:[#allocation2 + $0xa8] sm:$0xff] %v804
    %935 = vst [vmem:[#allocation2 + $0xb0] sm:$0xff] %v806
    %936 = vst [vmem:[#allocation2 + $0xb8] sm:$0xff] %v910
    %v937 = vld [vmem:[#allocation9] sm:$0xff]
    %v938 = vld [vmem:[#allocation9 + $0x8] sm:$0xff]
    %v939 = vld [vmem:[#allocation9 + $0x10] sm:$0xff]
    %v940 = vld [vmem:[#allocation9 + $0x18] sm:$0xff]
    %v941 = vld [vmem:[#allocation9 + $0x20] sm:$0xff]
    %v942 = vld [vmem:[#allocation9 + $0x28] sm:$0xff]
    %v943 = vld [vmem:[#allocation9 + $0x30] sm:$0xff]
    %v944 = vld [vmem:[#allocation9 + $0x38] sm:$0xff]
    %v945 = vld [vmem:[#allocation9 + $0x40] sm:$0xff]
    %v946 = vld [vmem:[#allocation9 + $0x48] sm:$0xff]
    %v947 = vld [vmem:[#allocation9 + $0x50] sm:$0xff]
    %v948 = vld [vmem:[#allocation9 + $0x58] sm:$0xff]
    %v949 = vld [vmem:[#allocation9 + $0x60] sm:$0xff]
    %v950 = vld [vmem:[#allocation9 + $0x68] sm:$0xff]
    %v951 = vld [vmem:[#allocation9 + $0x70] sm:$0xff]
    %v952 = vld [vmem:[#allocation9 + $0x78] sm:$0xff]
    %v953 = vld [vmem:[#allocation9 + $0x80] sm:$0xff]
    %v954 = vld [vmem:[#allocation9 + $0x88] sm:$0xff]
    %v955 = vld [vmem:[#allocation9 + $0x90] sm:$0xff]
    %v956 = vld [vmem:[#allocation9 + $0x98] sm:$0xff]
    %v957 = vld [vmem:[#allocation9 + $0xa0] sm:$0xff]
    %v958 = vld [vmem:[#allocation9 + $0xa8] sm:$0xff]
    %v959 = vld [vmem:[#allocation9 + $0xb0] sm:$0xff]
    %v960 = vld [vmem:[#allocation9 + $0xb8] sm:$0xff]
    %v961 = vld [vmem:[#allocation9 + $0xc0] sm:$0xff]
    %v962 = vld [vmem:[#allocation9 + $0xc8] sm:$0xff]
    %v963 = vld [vmem:[#allocation9 + $0xd0] sm:$0xff]
    %v964 = vld [vmem:[#allocation9 + $0xd8] sm:$0xff]
    %v965 = vld [vmem:[#allocation9 + $0xe0] sm:$0xff]
    %v966 = vld [vmem:[#allocation9 + $0xe8] sm:$0xff]
    %v967 = vld [vmem:[#allocation9 + $0xf0] sm:$0xff]
    %v968 = vld [vmem:[#allocation9 + $0xf8] sm:$0xff]
    %v969 = vld [vmem:[#allocation9 + $0x100] sm:$0xff]
    %v970 = vld [vmem:[#allocation9 + $0x108] sm:$0xff]
    %v971 = vld [vmem:[#allocation9 + $0x110] sm:$0xff]
    %v972 = vld [vmem:[#allocation9 + $0x118] sm:$0xff]
    %v973 = vld [vmem:[#allocation9 + $0x120] sm:$0xff]
    %v974 = vld [vmem:[#allocation9 + $0x128] sm:$0xff]
    %v975 = vld [vmem:[#allocation9 + $0x130] sm:$0xff]
    %v976 = vld [vmem:[#allocation9 + $0x138] sm:$0xff]
    %v977 = vld [vmem:[#allocation9 + $0x140] sm:$0xff]
    %v978 = vld [vmem:[#allocation9 + $0x148] sm:$0xff]
    %v979 = vld [vmem:[#allocation9 + $0x150] sm:$0xff]
    %v980 = vld [vmem:[#allocation9 + $0x158] sm:$0xff]
    %v981 = vld [vmem:[#allocation9 + $0x160] sm:$0xff]
    %v982 = vld [vmem:[#allocation9 + $0x168] sm:$0xff]
    %v983 = vld [vmem:[#allocation9 + $0x170] sm:$0xff]
    %v984 = vld [vmem:[#allocation9 + $0x178] sm:$0xff]
    %v985 = vld [vmem:[%s9] sm:$0x7]
    %v987 = vlaneseq
    %v988 = vshrl.u32 %v987, 7
    %v989 = vsub.s32 0, %v988
    %v990 = vrot.slane %v985, %v989
    %v991 = vlaneseq
    %v992 = vshrl.u32 %v991, 7
    %v993 = vsub.s32 1, %v992
    %v994 = vrot.slane %v985, %v993
    %v995 = vlaneseq
    %v996 = vshrl.u32 %v995, 7
    %v997 = vsub.s32 2, %v996
    %v998 = vrot.slane %v985, %v997
    %1002 = vmatprep.subr.mxu0 %v938
    %1003 = vmatpush1.msra.mxu0 %v937
    %1004 = vmatprep.subr.mxu0 %v941
    %1005 = vmatpush1.msra.mxu0 %v940
    %1006 = vmatprep.subr.mxu0 %v944
    %1007 = vmatpush1.msra.mxu0 %v943
    %1008 = vmatprep.subr.mxu0 %v947
    %1009 = vmatpush1.msra.mxu0 %v946
    %1010 = vmatprep.subr.mxu0 %v950
    %1011 = vmatpush1.msra.mxu0 %v949
    %1012 = vmatprep.subr.mxu0 %v953
    %1013 = vmatpush1.msra.mxu0 %v952
    %1014 = vmatprep.subr.mxu0 %v956
    %1015 = vmatpush1.msra.mxu0 %v955
    %1016 = vmatprep.subr.mxu0 %v959
    %1017 = vmatpush1.msra.mxu0 %v958
    %1018 = vmatprep.subr.mxu0 %v962
    %1019 = vmatpush1.msra.mxu0 %v961
    %1020 = vmatprep.subr.mxu0 %v965
    %1021 = vmatpush1.msra.mxu0 %v964
    %1022 = vmatprep.subr.mxu0 %v968
    %1023 = vmatpush1.msra.mxu0 %v967
    %1024 = vmatprep.subr.mxu0 %v971
    %1025 = vmatpush1.msra.mxu0 %v970
    %1026 = vmatprep.subr.mxu0 %v974
    %1027 = vmatpush1.msra.mxu0 %v973
    %1028 = vmatprep.subr.mxu0 %v977
    %1029 = vmatpush1.msra.mxu0 %v976
    %1030 = vmatprep.subr.mxu0 %v980
    %1031 = vmatpush1.msra.mxu0 %v979
    %1032 = vmatprep.subr.mxu0 %v983
    %1033 = vmatpush1.msra.mxu0 %v982
    %1034 = vmatprep.subr.mxu0 0.0
    %1035 = vmatpush1.msra.mxu0 0.0
    %1036 = vmatprep.subr.mxu0 0.0
    %1037 = vmatpush1.msra.mxu0 0.0
    %1038 = vmatprep.subr.mxu0 0.0
    %1039 = vmatpush1.msra.mxu0 0.0
    %1040 = vmatprep.subr.mxu0 0.0
    %1041 = vmatpush1.msra.mxu0 0.0
    %1042 = vmatprep.subr.mxu0 0.0
    %1043 = vmatpush1.msra.mxu0 0.0
    %1044 = vmatprep.subr.mxu0 0.0
    %1045 = vmatpush1.msra.mxu0 0.0
    %1046 = vmatprep.subr.mxu0 0.0
    %1047 = vmatpush1.msra.mxu0 0.0
    %1048 = vmatprep.subr.mxu0 0.0
    %1049 = vmatpush1.msra.mxu0 0.0
    %1050 = vmatprep.subr.mxu0 0.0
    %1051 = vmatpush1.msra.mxu0 0.0
    %1052 = vmatprep.subr.mxu0 0.0
    %1053 = vmatpush1.msra.mxu0 0.0
    %1054 = vmatprep.subr.mxu0 0.0
    %1055 = vmatpush1.msra.mxu0 0.0
    %1056 = vmatprep.subr.mxu0 0.0
    %1057 = vmatpush1.msra.mxu0 0.0
    %1058 = vmatprep.subr.mxu0 0.0
    %1059 = vmatpush1.msra.mxu0 0.0
    %1060 = vmatprep.subr.mxu0 0.0
    %1061 = vmatpush1.msra.mxu0 0.0
    %1062 = vmatprep.subr.mxu0 0.0
    %1063 = vmatpush1.msra.mxu0 0.0
    %1064 = vmatprep.subr.mxu0 0.0
    %1065 = vmatpush1.msra.mxu0 0.0
    %1066 = vmatprep.mubr.f32.mxu0 0.0
    %1067 = vmatmul.mubr.f32.gmra.mrb[0].mxu0 0.0
    %v1068 = vpop.f32.mrb[0].mxu0
    %v1069 = vadd.f32 %v990, %v1068
    %v1070 = vpop.f32.mrb[0].mxu0
    %v1071 = vadd.f32 %v994, %v1070
    %1072 = vmatprep.mubr.f32.mxu0 0.0
    %1073 = vmatmul.mubr.f32.gmra.mrb[0].mxu0 0.0
    %v1074 = vpop.f32.mrb[0].mxu0
    %v1075 = vadd.f32 %v990, %v1074
    %v1076 = vpop.f32.mrb[0].mxu0
    %v1077 = vadd.f32 %v994, %v1076
    %1078 = vdwg.mxu0
    %1079 = vmatprep.subr.mxu0 0.0
    %1080 = vmatpush1.msra.mxu0 %v939
    %1081 = vmatprep.subr.mxu0 0.0
    %1082 = vmatpush1.msra.mxu0 %v942
    %1083 = vmatprep.subr.mxu0 0.0
    %1084 = vmatpush1.msra.mxu0 %v945
    %1085 = vmatprep.subr.mxu0 0.0
    %1086 = vmatpush1.msra.mxu0 %v948
    %1087 = vmatprep.subr.mxu0 0.0
    %1088 = vmatpush1.msra.mxu0 %v951
    %1089 = vmatprep.subr.mxu0 0.0
    %1090 = vmatpush1.msra.mxu0 %v954
    %1091 = vmatprep.subr.mxu0 0.0
    %1092 = vmatpush1.msra.mxu0 %v957
    %1093 = vmatprep.subr.mxu0 0.0
    %1094 = vmatpush1.msra.mxu0 %v960
    %1095 = vmatprep.subr.mxu0 0.0
    %1096 = vmatpush1.msra.mxu0 %v963
    %1097 = vmatprep.subr.mxu0 0.0
    %1098 = vmatpush1.msra.mxu0 %v966
    %1099 = vmatprep.subr.mxu0 0.0
    %1100 = vmatpush1.msra.mxu0 %v969
    %1101 = vmatprep.subr.mxu0 0.0
    %1102 = vmatpush1.msra.mxu0 %v972
    %1103 = vmatprep.subr.mxu0 0.0
    %1104 = vmatpush1.msra.mxu0 %v975
    %1105 = vmatprep.subr.mxu0 0.0
    %1106 = vmatpush1.msra.mxu0 %v978
    %1107 = vmatprep.subr.mxu0 0.0
    %1108 = vmatpush1.msra.mxu0 %v981
    %1109 = vmatprep.subr.mxu0 0.0
    %1110 = vmatpush1.msra.mxu0 %v984
    %1111 = vmatprep.subr.mxu0 0.0
    %1112 = vmatpush1.msra.mxu0 0.0
    %1113 = vmatprep.subr.mxu0 0.0
    %1114 = vmatpush1.msra.mxu0 0.0
    %1115 = vmatprep.subr.mxu0 0.0
    %1116 = vmatpush1.msra.mxu0 0.0
    %1117 = vmatprep.subr.mxu0 0.0
    %1118 = vmatpush1.msra.mxu0 0.0
    %1119 = vmatprep.subr.mxu0 0.0
    %1120 = vmatpush1.msra.mxu0 0.0
    %1121 = vmatprep.subr.mxu0 0.0
    %1122 = vmatpush1.msra.mxu0 0.0
    %1123 = vmatprep.subr.mxu0 0.0
    %1124 = vmatpush1.msra.mxu0 0.0
    %1125 = vmatprep.subr.mxu0 0.0
    %1126 = vmatpush1.msra.mxu0 0.0
    %1127 = vmatprep.subr.mxu0 0.0
    %1128 = vmatpush1.msra.mxu0 0.0
    %1129 = vmatprep.subr.mxu0 0.0
    %1130 = vmatpush1.msra.mxu0 0.0
    %1131 = vmatprep.subr.mxu0 0.0
    %1132 = vmatpush1.msra.mxu0 0.0
    %1133 = vmatprep.subr.mxu0 0.0
    %1134 = vmatpush1.msra.mxu0 0.0
    %1135 = vmatprep.subr.mxu0 0.0
    %1136 = vmatpush1.msra.mxu0 0.0
    %1137 = vmatprep.subr.mxu0 0.0
    %1138 = vmatpush1.msra.mxu0 0.0
    %1139 = vmatprep.subr.mxu0 0.0
    %1140 = vmatpush1.msra.mxu0 0.0
    %1141 = vmatprep.subr.mxu0 0.0
    %1142 = vmatpush1.msra.mxu0 0.0
    %1143 = vmatprep.mubr.f32.mxu0 0.0
    %1144 = vmatmul.mubr.f32.gmra.mrb[0].mxu0 0.0
    %v1145 = vpop.f32.mrb[0].mxu0
    %v1146 = vadd.f32 %v998, %v1145
    %v1147 = vpop.f32.mrb[0].mxu0
    %1148 = vmatprep.mubr.f32.mxu0 0.0
    %1149 = vmatmul.mubr.f32.gmra.mrb[0].mxu0 0.0
    %v1150 = vpop.f32.mrb[0].mxu0
    %v1151 = vadd.f32 %v998, %v1150
    %v1152 = vpop.f32.mrb[0].mxu0
    %1153 = vdwg.mxu0
    %v1154 = vld [vmem:[#allocation2] sm:$0xff]
    %v1155 = vld [vmem:[#allocation2 + $0x8] sm:$0xff]
    %v1156 = vld [vmem:[#allocation2 + $0x10] sm:$0xff]
    %v1157 = vld [vmem:[#allocation2 + $0x18] sm:$0xff]
    %v1158 = vld [vmem:[#allocation2 + $0x20] sm:$0xff]
    %v1159 = vld [vmem:[#allocation2 + $0x28] sm:$0xff]
    %v1160 = vadd.f32 %v1154, %v1069
    %v1161 = vadd.f32 %v1157, %v1075
    %v1162 = vxor.u32 %v1160, 2147483648
    %v1163 = vxor.u32 %v1161, 2147483648
    %v1164 = vmul.f32 %v1162, 1.442695
    %v1165 = vpow.pop %v1164
    %v1166 = vmul.f32 %v1163, 1.442695
    %v1167 = vpow.pop %v1166
    %v1168 = vadd.f32 %v1165, 1.0
    %v1169 = vadd.f32 %v1167, 1.0
    %v1170 = vrcp.pop %v1168
    %v1171 = vmul.f32 1.0, %v1170
    %v1172 = vrcp.pop %v1169
    %v1173 = vmul.f32 1.0, %v1172
    %v1174 = vadd.f32 %v1155, %v1071
    %v1175 = vadd.f32 %v1158, %v1077
    %v1176 = vxor.u32 %v1174, 2147483648
    %v1177 = vxor.u32 %v1175, 2147483648
    %v1178 = vmul.f32 %v1176, 1.442695
    %v1179 = vpow.pop %v1178
    %v1180 = vmul.f32 %v1177, 1.442695
    %v1181 = vpow.pop %v1180
    %v1182 = vadd.f32 %v1179, 1.0
    %v1183 = vadd.f32 %v1181, 1.0
    %v1184 = vrcp.pop %v1182
    %v1185 = vmul.f32 1.0, %v1184
    %v1186 = vrcp.pop %v1183
    %v1187 = vmul.f32 1.0, %v1186
    %v1188 = vmul.f32 %v1171, %v1146
    %v1189 = vmul.f32 %v1173, %v1151
    %v1190 = vadd.f32 %v1156, %v1188
    %v1191 = vadd.f32 %v1159, %v1189
    %v1192 = vtanh.pop %v1190
    %v1193 = vtanh.pop %v1191
    %v1194 = vsub.f32 1.0, %v1185
    %v1195 = vsub.f32 1.0, %v1187
    %v1196 = vmul.f32 %v1194, %v1192
    %v1197 = vmul.f32 %v1195, %v1193
    %v1198 = vmul.f32 %v1185, 0.0
    %v1199 = vmul.f32 %v1187, 0.0
    %v1200 = vadd.f32 %v1196, %v1198
    %v1201 = vadd.f32 %v1197, %v1199
    %1202 = vst [vmem:[#allocation3] sm:$0xff] %v1200
    %1203 = vst [vmem:[#allocation3 + $0x8] sm:$0xff] %v1201
    %1204 = vmatprep.subr.mxu0 %v938
    %1205 = vmatpush1.msra.mxu0 %v937
    %1206 = vmatprep.subr.mxu0 %v941
    %1207 = vmatpush1.msra.mxu0 %v940
    %1208 = vmatprep.subr.mxu0 %v944
    %1209 = vmatpush1.msra.mxu0 %v943
    %1210 = vmatprep.subr.mxu0 %v947
    %1211 = vmatpush1.msra.mxu0 %v946
    %1212 = vmatprep.subr.mxu0 %v950
    %1213 = vmatpush1.msra.mxu0 %v949
    %1214 = vmatprep.subr.mxu0 %v953
    %1215 = vmatpush1.msra.mxu0 %v952
    %1216 = vmatprep.subr.mxu0 %v956
    %1217 = vmatpush1.msra.mxu0 %v955
    %1218 = vmatprep.subr.mxu0 %v959
    %1219 = vmatpush1.msra.mxu0 %v958
    %1220 = vmatprep.subr.mxu0 %v962
    %1221 = vmatpush1.msra.mxu0 %v961
    %1222 = vmatprep.subr.mxu0 %v965
    %1223 = vmatpush1.msra.mxu0 %v964
    %1224 = vmatprep.subr.mxu0 %v968
    %1225 = vmatpush1.msra.mxu0 %v967
    %1226 = vmatprep.subr.mxu0 %v971
    %1227 = vmatpush1.msra.mxu0 %v970
    %1228 = vmatprep.subr.mxu0 %v974
    %1229 = vmatpush1.msra.mxu0 %v973
    %1230 = vmatprep.subr.mxu0 %v977
    %1231 = vmatpush1.msra.mxu0 %v976
    %1232 = vmatprep.subr.mxu0 %v980
    %1233 = vmatpush1.msra.mxu0 %v979
    %1234 = vmatprep.subr.mxu0 %v983
    %1235 = vmatpush1.msra.mxu0 %v982
    %1236 = vmatprep.subr.mxu0 0.0
    %1237 = vmatpush1.msra.mxu0 0.0
    %1238 = vmatprep.subr.mxu0 0.0
    %1239 = vmatpush1.msra.mxu0 0.0
    %1240 = vmatprep.subr.mxu0 0.0
    %1241 = vmatpush1.msra.mxu0 0.0
    %1242 = vmatprep.subr.mxu0 0.0
    %1243 = vmatpush1.msra.mxu0 0.0
    %1244 = vmatprep.subr.mxu0 0.0
    %1245 = vmatpush1.msra.mxu0 0.0
    %1246 = vmatprep.subr.mxu0 0.0
    %1247 = vmatpush1.msra.mxu0 0.0
    %1248 = vmatprep.subr.mxu0 0.0
    %1249 = vmatpush1.msra.mxu0 0.0
    %1250 = vmatprep.subr.mxu0 0.0
    %1251 = vmatpush1.msra.mxu0 0.0
    %1252 = vmatprep.subr.mxu0 0.0
    %1253 = vmatpush1.msra.mxu0 0.0
    %1254 = vmatprep.subr.mxu0 0.0
    %1255 = vmatpush1.msra.mxu0 0.0
    %1256 = vmatprep.subr.mxu0 0.0
    %1257 = vmatpush1.msra.mxu0 0.0
    %1258 = vmatprep.subr.mxu0 0.0
    %1259 = vmatpush1.msra.mxu0 0.0
    %1260 = vmatprep.subr.mxu0 0.0
    %1261 = vmatpush1.msra.mxu0 0.0
    %1262 = vmatprep.subr.mxu0 0.0
    %1263 = vmatpush1.msra.mxu0 0.0
    %1264 = vmatprep.subr.mxu0 0.0
    %1265 = vmatpush1.msra.mxu0 0.0
    %1266 = vmatprep.subr.mxu0 0.0
    %1267 = vmatpush1.msra.mxu0 0.0
    %1268 = vmatprep.mubr.f32.mxu0 0.0
    %1269 = vmatmul.mubr.f32.gmra.mrb[0].mxu0 %v1200
    %v1270 = vpop.f32.mrb[0].mxu0
    %v1271 = vadd.f32 %v990, %v1270
    %v1272 = vpop.f32.mrb[0].mxu0
    %v1273 = vadd.f32 %v994, %v1272
    %1274 = vmatprep.mubr.f32.mxu0 0.0
    %1275 = vmatmul.mubr.f32.gmra.mrb[0].mxu0 %v1201
    %v1276 = vpop.f32.mrb[0].mxu0
    %v1277 = vadd.f32 %v990, %v1276
    %v1278 = vpop.f32.mrb[0].mxu0
    %v1279 = vadd.f32 %v994, %v1278
    %1280 = vdwg.mxu0
    %1281 = vmatprep.subr.mxu0 0.0
    %1282 = vmatpush1.msra.mxu0 %v939
    %1283 = vmatprep.subr.mxu0 0.0
    %1284 = vmatpush1.msra.mxu0 %v942
    %1285 = vmatprep.subr.mxu0 0.0
    %1286 = vmatpush1.msra.mxu0 %v945
    %1287 = vmatprep.subr.mxu0 0.0
    %1288 = vmatpush1.msra.mxu0 %v948
    %1289 = vmatprep.subr.mxu0 0.0
    %1290 = vmatpush1.msra.mxu0 %v951
    %1291 = vmatprep.subr.mxu0 0.0
    %1292 = vmatpush1.msra.mxu0 %v954
    %1293 = vmatprep.subr.mxu0 0.0
    %1294 = vmatpush1.msra.mxu0 %v957
    %1295 = vmatprep.subr.mxu0 0.0
    %1296 = vmatpush1.msra.mxu0 %v960
    %1297 = vmatprep.subr.mxu0 0.0
    %1298 = vmatpush1.msra.mxu0 %v963
    %1299 = vmatprep.subr.mxu0 0.0
    %1300 = vmatpush1.msra.mxu0 %v966
    %1301 = vmatprep.subr.mxu0 0.0
    %1302 = vmatpush1.msra.mxu0 %v969
    %1303 = vmatprep.subr.mxu0 0.0
    %1304 = vmatpush1.msra.mxu0 %v972
    %1305 = vmatprep.subr.mxu0 0.0
    %1306 = vmatpush1.msra.mxu0 %v975
    %1307 = vmatprep.subr.mxu0 0.0
    %1308 = vmatpush1.msra.mxu0 %v978
    %1309 = vmatprep.subr.mxu0 0.0
    %1310 = vmatpush1.msra.mxu0 %v981
    %1311 = vmatprep.subr.mxu0 0.0
    %1312 = vmatpush1.msra.mxu0 %v984
    %1313 = vmatprep.subr.mxu0 0.0
    %1314 = vmatpush1.msra.mxu0 0.0
    %1315 = vmatprep.subr.mxu0 0.0
    %1316 = vmatpush1.msra.mxu0 0.0
    %1317 = vmatprep.subr.mxu0 0.0
    %1318 = vmatpush1.msra.mxu0 0.0
    %1319 = vmatprep.subr.mxu0 0.0
    %1320 = vmatpush1.msra.mxu0 0.0
    %1321 = vmatprep.subr.mxu0 0.0
    %1322 = vmatpush1.msra.mxu0 0.0
    %1323 = vmatprep.subr.mxu0 0.0
    %1324 = vmatpush1.msra.mxu0 0.0
    %1325 = vmatprep.subr.mxu0 0.0
    %1326 = vmatpush1.msra.mxu0 0.0
    %1327 = vmatprep.subr.mxu0 0.0
    %1328 = vmatpush1.msra.mxu0 0.0
    %1329 = vmatprep.subr.mxu0 0.0
    %1330 = vmatpush1.msra.mxu0 0.0
    %1331 = vmatprep.subr.mxu0 0.0
    %1332 = vmatpush1.msra.mxu0 0.0
    %1333 = vmatprep.subr.mxu0 0.0
    %1334 = vmatpush1.msra.mxu0 0.0
    %1335 = vmatprep.subr.mxu0 0.0
    %1336 = vmatpush1.msra.mxu0 0.0
    %1337 = vmatprep.subr.mxu0 0.0
    %1338 = vmatpush1.msra.mxu0 0.0
    %1339 = vmatprep.subr.mxu0 0.0
    %1340 = vmatpush1.msra.mxu0 0.0
    %1341 = vmatprep.subr.mxu0 0.0
    %1342 = vmatpush1.msra.mxu0 0.0
    %1343 = vmatprep.subr.mxu0 0.0
    %1344 = vmatpush1.msra.mxu0 0.0
    %1345 = vmatprep.mubr.f32.mxu0 0.0
    %1346 = vmatmul.mubr.f32.gmra.mrb[0].mxu0 %v1200
    %v1347 = vpop.f32.mrb[0].mxu0
    %v1348 = vadd.f32 %v998, %v1347
    %v1349 = vpop.f32.mrb[0].mxu0
    %1350 = vmatprep.mubr.f32.mxu0 0.0
    %1351 = vmatmul.mubr.f32.gmra.mrb[0].mxu0 %v1201
    %v1352 = vpop.f32.mrb[0].mxu0
    %v1353 = vadd.f32 %v998, %v1352
    %v1354 = vpop.f32.mrb[0].mxu0
    %1355 = vdwg.mxu0
    %v1356 = vld [vmem:[#allocation2 + $0x30] sm:$0xff]
    %v1357 = vld [vmem:[#allocation2 + $0x38] sm:$0xff]
    %v1358 = vld [vmem:[#allocation2 + $0x40] sm:$0xff]
    %v1359 = vld [vmem:[#allocation2 + $0x48] sm:$0xff]
    %v1360 = vld [vmem:[#allocation2 + $0x50] sm:$0xff]
    %v1361 = vld [vmem:[#allocation2 + $0x58] sm:$0xff]
    %v1362 = vadd.f32 %v1356, %v1271
    %v1363 = vadd.f32 %v1359, %v1277
    %v1364 = vxor.u32 %v1362, 2147483648
    %v1365 = vxor.u32 %v1363, 2147483648
    %v1366 = vmul.f32 %v1364, 1.442695
    %v1367 = vpow.pop %v1366
    %v1368 = vmul.f32 %v1365, 1.442695
    %v1369 = vpow.pop %v1368
    %v1370 = vadd.f32 %v1367, 1.0
    %v1371 = vadd.f32 %v1369, 1.0
    %v1372 = vrcp.pop %v1370
    %v1373 = vmul.f32 1.0, %v1372
    %v1374 = vrcp.pop %v1371
    %v1375 = vmul.f32 1.0, %v1374
    %v1376 = vadd.f32 %v1357, %v1273
    %v1377 = vadd.f32 %v1360, %v1279
    %v1378 = vxor.u32 %v1376, 2147483648
    %v1379 = vxor.u32 %v1377, 2147483648
    %v1380 = vmul.f32 %v1378, 1.442695
    %v1381 = vpow.pop %v1380
    %v1382 = vmul.f32 %v1379, 1.442695
    %v1383 = vpow.pop %v1382
    %v1384 = vadd.f32 %v1381, 1.0
    %v1385 = vadd.f32 %v1383, 1.0
    %v1386 = vrcp.pop %v1384
    %v1387 = vmul.f32 1.0, %v1386
    %v1388 = vrcp.pop %v1385
    %v1389 = vmul.f32 1.0, %v1388
    %v1390 = vmul.f32 %v1373, %v1348
    %v1391 = vmul.f32 %v1375, %v1353
    %v1392 = vadd.f32 %v1358, %v1390
    %v1393 = vadd.f32 %v1361, %v1391
    %v1394 = vtanh.pop %v1392
    %v1395 = vtanh.pop %v1393
    %v1396 = vsub.f32 1.0, %v1387
    %v1397 = vsub.f32 1.0, %v1389
    %v1398 = vmul.f32 %v1396, %v1394
    %v1399 = vmul.f32 %v1397, %v1395
    %v1400 = vmul.f32 %v1387, %v1200
    %v1401 = vmul.f32 %v1389, %v1201
    %v1402 = vadd.f32 %v1398, %v1400
    %v1403 = vadd.f32 %v1399, %v1401
    %1404 = vst [vmem:[#allocation3 + $0x10] sm:$0xff] %v1402
    %1405 = vst [vmem:[#allocation3 + $0x18] sm:$0xff] %v1403
    %1406 = vmatprep.subr.mxu0 %v938
    %1407 = vmatpush1.msra.mxu0 %v937
    %1408 = vmatprep.subr.mxu0 %v941
    %1409 = vmatpush1.msra.mxu0 %v940
    %1410 = vmatprep.subr.mxu0 %v944
    %1411 = vmatpush1.msra.mxu0 %v943
    %1412 = vmatprep.subr.mxu0 %v947
    %1413 = vmatpush1.msra.mxu0 %v946
    %1414 = vmatprep.subr.mxu0 %v950
    %1415 = vmatpush1.msra.mxu0 %v949
    %1416 = vmatprep.subr.mxu0 %v953
    %1417 = vmatpush1.msra.mxu0 %v952
    %1418 = vmatprep.subr.mxu0 %v956
    %1419 = vmatpush1.msra.mxu0 %v955
    %1420 = vmatprep.subr.mxu0 %v959
    %1421 = vmatpush1.msra.mxu0 %v958
    %1422 = vmatprep.subr.mxu0 %v962
    %1423 = vmatpush1.msra.mxu0 %v961
    %1424 = vmatprep.subr.mxu0 %v965
    %1425 = vmatpush1.msra.mxu0 %v964
    %1426 = vmatprep.subr.mxu0 %v968
    %1427 = vmatpush1.msra.mxu0 %v967
    %1428 = vmatprep.subr.mxu0 %v971
    %1429 = vmatpush1.msra.mxu0 %v970
    %1430 = vmatprep.subr.mxu0 %v974
    %1431 = vmatpush1.msra.mxu0 %v973
    %1432 = vmatprep.subr.mxu0 %v977
    %1433 = vmatpush1.msra.mxu0 %v976
    %1434 = vmatprep.subr.mxu0 %v980
    %1435 = vmatpush1.msra.mxu0 %v979
    %1436 = vmatprep.subr.mxu0 %v983
    %1437 = vmatpush1.msra.mxu0 %v982
    %1438 = vmatprep.subr.mxu0 0.0
    %1439 = vmatpush1.msra.mxu0 0.0
    %1440 = vmatprep.subr.mxu0 0.0
    %1441 = vmatpush1.msra.mxu0 0.0
    %1442 = vmatprep.subr.mxu0 0.0
    %1443 = vmatpush1.msra.mxu0 0.0
    %1444 = vmatprep.subr.mxu0 0.0
    %1445 = vmatpush1.msra.mxu0 0.0
    %1446 = vmatprep.subr.mxu0 0.0
    %1447 = vmatpush1.msra.mxu0 0.0
    %1448 = vmatprep.subr.mxu0 0.0
    %1449 = vmatpush1.msra.mxu0 0.0
    %1450 = vmatprep.subr.mxu0 0.0
    %1451 = vmatpush1.msra.mxu0 0.0
    %1452 = vmatprep.subr.mxu0 0.0
    %1453 = vmatpush1.msra.mxu0 0.0
    %1454 = vmatprep.subr.mxu0 0.0
    %1455 = vmatpush1.msra.mxu0 0.0
    %1456 = vmatprep.subr.mxu0 0.0
    %1457 = vmatpush1.msra.mxu0 0.0
    %1458 = vmatprep.subr.mxu0 0.0
    %1459 = vmatpush1.msra.mxu0 0.0
    %1460 = vmatprep.subr.mxu0 0.0
    %1461 = vmatpush1.msra.mxu0 0.0
    %1462 = vmatprep.subr.mxu0 0.0
    %1463 = vmatpush1.msra.mxu0 0.0
    %1464 = vmatprep.subr.mxu0 0.0
    %1465 = vmatpush1.msra.mxu0 0.0
    %1466 = vmatprep.subr.mxu0 0.0
    %1467 = vmatpush1.msra.mxu0 0.0
    %1468 = vmatprep.subr.mxu0 0.0
    %1469 = vmatpush1.msra.mxu0 0.0
    %1470 = vmatprep.mubr.f32.mxu0 0.0
    %1471 = vmatmul.mubr.f32.gmra.mrb[0].mxu0 %v1402
    %v1472 = vpop.f32.mrb[0].mxu0
    %v1473 = vadd.f32 %v990, %v1472
    %v1474 = vpop.f32.mrb[0].mxu0
    %v1475 = vadd.f32 %v994, %v1474
    %1476 = vmatprep.mubr.f32.mxu0 0.0
    %1477 = vmatmul.mubr.f32.gmra.mrb[0].mxu0 %v1403
    %v1478 = vpop.f32.mrb[0].mxu0
    %v1479 = vadd.f32 %v990, %v1478
    %v1480 = vpop.f32.mrb[0].mxu0
    %v1481 = vadd.f32 %v994, %v1480
    %1482 = vdwg.mxu0
    %1483 = vmatprep.subr.mxu0 0.0
    %1484 = vmatpush1.msra.mxu0 %v939
    %1485 = vmatprep.subr.mxu0 0.0
    %1486 = vmatpush1.msra.mxu0 %v942
    %1487 = vmatprep.subr.mxu0 0.0
    %1488 = vmatpush1.msra.mxu0 %v945
    %1489 = vmatprep.subr.mxu0 0.0
    %1490 = vmatpush1.msra.mxu0 %v948
    %1491 = vmatprep.subr.mxu0 0.0
    %1492 = vmatpush1.msra.mxu0 %v951
    %1493 = vmatprep.subr.mxu0 0.0
    %1494 = vmatpush1.msra.mxu0 %v954
    %1495 = vmatprep.subr.mxu0 0.0
    %1496 = vmatpush1.msra.mxu0 %v957
    %1497 = vmatprep.subr.mxu0 0.0
    %1498 = vmatpush1.msra.mxu0 %v960
    %1499 = vmatprep.subr.mxu0 0.0
    %1500 = vmatpush1.msra.mxu0 %v963
    %1501 = vmatprep.subr.mxu0 0.0
    %1502 = vmatpush1.msra.mxu0 %v966
    %1503 = vmatprep.subr.mxu0 0.0
    %1504 = vmatpush1.msra.mxu0 %v969
    %1505 = vmatprep.subr.mxu0 0.0
    %1506 = vmatpush1.msra.mxu0 %v972
    %1507 = vmatprep.subr.mxu0 0.0
    %1508 = vmatpush1.msra.mxu0 %v975
    %1509 = vmatprep.subr.mxu0 0.0
    %1510 = vmatpush1.msra.mxu0 %v978
    %1511 = vmatprep.subr.mxu0 0.0
    %1512 = vmatpush1.msra.mxu0 %v981
    %1513 = vmatprep.subr.mxu0 0.0
    %1514 = vmatpush1.msra.mxu0 %v984
    %1515 = vmatprep.subr.mxu0 0.0
    %1516 = vmatpush1.msra.mxu0 0.0
    %1517 = vmatprep.subr.mxu0 0.0
    %1518 = vmatpush1.msra.mxu0 0.0
    %1519 = vmatprep.subr.mxu0 0.0
    %1520 = vmatpush1.msra.mxu0 0.0
    %1521 = vmatprep.subr.mxu0 0.0
    %1522 = vmatpush1.msra.mxu0 0.0
    %1523 = vmatprep.subr.mxu0 0.0
    %1524 = vmatpush1.msra.mxu0 0.0
    %1525 = vmatprep.subr.mxu0 0.0
    %1526 = vmatpush1.msra.mxu0 0.0
    %1527 = vmatprep.subr.mxu0 0.0
    %1528 = vmatpush1.msra.mxu0 0.0
    %1529 = vmatprep.subr.mxu0 0.0
    %1530 = vmatpush1.msra.mxu0 0.0
    %1531 = vmatprep.subr.mxu0 0.0
    %1532 = vmatpush1.msra.mxu0 0.0
    %1533 = vmatprep.subr.mxu0 0.0
    %1534 = vmatpush1.msra.mxu0 0.0
    %1535 = vmatprep.subr.mxu0 0.0
    %1536 = vmatpush1.msra.mxu0 0.0
    %1537 = vmatprep.subr.mxu0 0.0
    %1538 = vmatpush1.msra.mxu0 0.0
    %1539 = vmatprep.subr.mxu0 0.0
    %1540 = vmatpush1.msra.mxu0 0.0
    %1541 = vmatprep.subr.mxu0 0.0
    %1542 = vmatpush1.msra.mxu0 0.0
    %1543 = vmatprep.subr.mxu0 0.0
    %1544 = vmatpush1.msra.mxu0 0.0
    %1545 = vmatprep.subr.mxu0 0.0
    %1546 = vmatpush1.msra.mxu0 0.0
    %1547 = vmatprep.mubr.f32.mxu0 0.0
    %1548 = vmatmul.mubr.f32.gmra.mrb[0].mxu0 %v1402
    %v1549 = vpop.f32.mrb[0].mxu0
    %v1550 = vadd.f32 %v998, %v1549
    %v1551 = vpop.f32.mrb[0].mxu0
    %1552 = vmatprep.mubr.f32.mxu0 0.0
    %1553 = vmatmul.mubr.f32.gmra.mrb[0].mxu0 %v1403
    %v1554 = vpop.f32.mrb[0].mxu0
    %v1555 = vadd.f32 %v998, %v1554
    %v1556 = vpop.f32.mrb[0].mxu0
    %1557 = vdwg.mxu0
    %v1558 = vld [vmem:[#allocation2 + $0x60] sm:$0xff]
    %v1559 = vld [vmem:[#allocation2 + $0x68] sm:$0xff]
    %v1560 = vld [vmem:[#allocation2 + $0x70] sm:$0xff]
    %v1561 = vld [vmem:[#allocation2 + $0x78] sm:$0xff]
    %v1562 = vld [vmem:[#allocation2 + $0x80] sm:$0xff]
    %v1563 = vld [vmem:[#allocation2 + $0x88] sm:$0xff]
    %v1564 = vadd.f32 %v1558, %v1473
    %v1565 = vadd.f32 %v1561, %v1479
    %v1566 = vxor.u32 %v1564, 2147483648
    %v1567 = vxor.u32 %v1565, 2147483648
    %v1568 = vmul.f32 %v1566, 1.442695
    %v1569 = vpow.pop %v1568
    %v1570 = vmul.f32 %v1567, 1.442695
    %v1571 = vpow.pop %v1570
    %v1572 = vadd.f32 %v1569, 1.0
    %v1573 = vadd.f32 %v1571, 1.0
    %v1574 = vrcp.pop %v1572
    %v1575 = vmul.f32 1.0, %v1574
    %v1576 = vrcp.pop %v1573
    %v1577 = vmul.f32 1.0, %v1576
    %v1578 = vadd.f32 %v1559, %v1475
    %v1579 = vadd.f32 %v1562, %v1481
    %v1580 = vxor.u32 %v1578, 2147483648
    %v1581 = vxor.u32 %v1579, 2147483648
    %v1582 = vmul.f32 %v1580, 1.442695
    %v1583 = vpow.pop %v1582
    %v1584 = vmul.f32 %v1581, 1.442695
    %v1585 = vpow.pop %v1584
    %v1586 = vadd.f32 %v1583, 1.0
    %v1587 = vadd.f32 %v1585, 1.0
    %v1588 = vrcp.pop %v1586
    %v1589 = vmul.f32 1.0, %v1588
    %v1590 = vrcp.pop %v1587
    %v1591 = vmul.f32 1.0, %v1590
    %v1592 = vmul.f32 %v1575, %v1550
    %v1593 = vmul.f32 %v1577, %v1555
    %v1594 = vadd.f32 %v1560, %v1592
    %v1595 = vadd.f32 %v1563, %v1593
    %v1596 = vtanh.pop %v1594
    %v1597 = vtanh.pop %v1595
    %v1598 = vsub.f32 1.0, %v1589
    %v1599 = vsub.f32 1.0, %v1591
    %v1600 = vmul.f32 %v1598, %v1596
    %v1601 = vmul.f32 %v1599, %v1597
    %v1602 = vmul.f32 %v1589, %v1402
    %v1603 = vmul.f32 %v1591, %v1403
    %v1604 = vadd.f32 %v1600, %v1602
    %v1605 = vadd.f32 %v1601, %v1603
    %1606 = vst [vmem:[#allocation3 + $0x20] sm:$0xff] %v1604
    %1607 = vst [vmem:[#allocation3 + $0x28] sm:$0xff] %v1605
    %1608 = vmatprep.subr.mxu0 %v938
    %1609 = vmatpush1.msra.mxu0 %v937
    %1610 = vmatprep.subr.mxu0 %v941
    %1611 = vmatpush1.msra.mxu0 %v940
    %1612 = vmatprep.subr.mxu0 %v944
    %1613 = vmatpush1.msra.mxu0 %v943
    %1614 = vmatprep.subr.mxu0 %v947
    %1615 = vmatpush1.msra.mxu0 %v946
    %1616 = vmatprep.subr.mxu0 %v950
    %1617 = vmatpush1.msra.mxu0 %v949
    %1618 = vmatprep.subr.mxu0 %v953
    %1619 = vmatpush1.msra.mxu0 %v952
    %1620 = vmatprep.subr.mxu0 %v956
    %1621 = vmatpush1.msra.mxu0 %v955
    %1622 = vmatprep.subr.mxu0 %v959
    %1623 = vmatpush1.msra.mxu0 %v958
    %1624 = vmatprep.subr.mxu0 %v962
    %1625 = vmatpush1.msra.mxu0 %v961
    %1626 = vmatprep.subr.mxu0 %v965
    %1627 = vmatpush1.msra.mxu0 %v964
    %1628 = vmatprep.subr.mxu0 %v968
    %1629 = vmatpush1.msra.mxu0 %v967
    %1630 = vmatprep.subr.mxu0 %v971
    %1631 = vmatpush1.msra.mxu0 %v970
    %1632 = vmatprep.subr.mxu0 %v974
    %1633 = vmatpush1.msra.mxu0 %v973
    %1634 = vmatprep.subr.mxu0 %v977
    %1635 = vmatpush1.msra.mxu0 %v976
    %1636 = vmatprep.subr.mxu0 %v980
    %1637 = vmatpush1.msra.mxu0 %v979
    %1638 = vmatprep.subr.mxu0 %v983
    %1639 = vmatpush1.msra.mxu0 %v982
    %1640 = vmatprep.subr.mxu0 0.0
    %1641 = vmatpush1.msra.mxu0 0.0
    %1642 = vmatprep.subr.mxu0 0.0
    %1643 = vmatpush1.msra.mxu0 0.0
    %1644 = vmatprep.subr.mxu0 0.0
    %1645 = vmatpush1.msra.mxu0 0.0
    %1646 = vmatprep.subr.mxu0 0.0
    %1647 = vmatpush1.msra.mxu0 0.0
    %1648 = vmatprep.subr.mxu0 0.0
    %1649 = vmatpush1.msra.mxu0 0.0
    %1650 = vmatprep.subr.mxu0 0.0
    %1651 = vmatpush1.msra.mxu0 0.0
    %1652 = vmatprep.subr.mxu0 0.0
    %1653 = vmatpush1.msra.mxu0 0.0
    %1654 = vmatprep.subr.mxu0 0.0
    %1655 = vmatpush1.msra.mxu0 0.0
    %1656 = vmatprep.subr.mxu0 0.0
    %1657 = vmatpush1.msra.mxu0 0.0
    %1658 = vmatprep.subr.mxu0 0.0
    %1659 = vmatpush1.msra.mxu0 0.0
    %1660 = vmatprep.subr.mxu0 0.0
    %1661 = vmatpush1.msra.mxu0 0.0
    %1662 = vmatprep.subr.mxu0 0.0
    %1663 = vmatpush1.msra.mxu0 0.0
    %1664 = vmatprep.subr.mxu0 0.0
    %1665 = vmatpush1.msra.mxu0 0.0
    %1666 = vmatprep.subr.mxu0 0.0
    %1667 = vmatpush1.msra.mxu0 0.0
    %1668 = vmatprep.subr.mxu0 0.0
    %1669 = vmatpush1.msra.mxu0 0.0
    %1670 = vmatprep.subr.mxu0 0.0
    %1671 = vmatpush1.msra.mxu0 0.0
    %1672 = vmatprep.mubr.f32.mxu0 0.0
    %1673 = vmatmul.mubr.f32.gmra.mrb[0].mxu0 %v1604
    %v1674 = vpop.f32.mrb[0].mxu0
    %v1675 = vadd.f32 %v990, %v1674
    %v1676 = vpop.f32.mrb[0].mxu0
    %v1677 = vadd.f32 %v994, %v1676
    %1678 = vmatprep.mubr.f32.mxu0 0.0
    %1679 = vmatmul.mubr.f32.gmra.mrb[0].mxu0 %v1605
    %v1680 = vpop.f32.mrb[0].mxu0
    %v1681 = vadd.f32 %v990, %v1680
    %v1682 = vpop.f32.mrb[0].mxu0
    %v1683 = vadd.f32 %v994, %v1682
    %1684 = vdwg.mxu0
    %1685 = vmatprep.subr.mxu0 0.0
    %1686 = vmatpush1.msra.mxu0 %v939
    %1687 = vmatprep.subr.mxu0 0.0
    %1688 = vmatpush1.msra.mxu0 %v942
    %1689 = vmatprep.subr.mxu0 0.0
    %1690 = vmatpush1.msra.mxu0 %v945
    %1691 = vmatprep.subr.mxu0 0.0
    %1692 = vmatpush1.msra.mxu0 %v948
    %1693 = vmatprep.subr.mxu0 0.0
    %1694 = vmatpush1.msra.mxu0 %v951
    %1695 = vmatprep.subr.mxu0 0.0
    %1696 = vmatpush1.msra.mxu0 %v954
    %1697 = vmatprep.subr.mxu0 0.0
    %1698 = vmatpush1.msra.mxu0 %v957
    %1699 = vmatprep.subr.mxu0 0.0
    %1700 = vmatpush1.msra.mxu0 %v960
    %1701 = vmatprep.subr.mxu0 0.0
    %1702 = vmatpush1.msra.mxu0 %v963
    %1703 = vmatprep.subr.mxu0 0.0
    %1704 = vmatpush1.msra.mxu0 %v966
    %1705 = vmatprep.subr.mxu0 0.0
    %1706 = vmatpush1.msra.mxu0 %v969
    %1707 = vmatprep.subr.mxu0 0.0
    %1708 = vmatpush1.msra.mxu0 %v972
    %1709 = vmatprep.subr.mxu0 0.0
    %1710 = vmatpush1.msra.mxu0 %v975
    %1711 = vmatprep.subr.mxu0 0.0
    %1712 = vmatpush1.msra.mxu0 %v978
    %1713 = vmatprep.subr.mxu0 0.0
    %1714 = vmatpush1.msra.mxu0 %v981
    %1715 = vmatprep.subr.mxu0 0.0
    %1716 = vmatpush1.msra.mxu0 %v984
    %1717 = vmatprep.subr.mxu0 0.0
    %1718 = vmatpush1.msra.mxu0 0.0
    %1719 = vmatprep.subr.mxu0 0.0
    %1720 = vmatpush1.msra.mxu0 0.0
    %1721 = vmatprep.subr.mxu0 0.0
    %1722 = vmatpush1.msra.mxu0 0.0
    %1723 = vmatprep.subr.mxu0 0.0
    %1724 = vmatpush1.msra.mxu0 0.0
    %1725 = vmatprep.subr.mxu0 0.0
    %1726 = vmatpush1.msra.mxu0 0.0
    %1727 = vmatprep.subr.mxu0 0.0
    %1728 = vmatpush1.msra.mxu0 0.0
    %1729 = vmatprep.subr.mxu0 0.0
    %1730 = vmatpush1.msra.mxu0 0.0
    %1731 = vmatprep.subr.mxu0 0.0
    %1732 = vmatpush1.msra.mxu0 0.0
    %1733 = vmatprep.subr.mxu0 0.0
    %1734 = vmatpush1.msra.mxu0 0.0
    %1735 = vmatprep.subr.mxu0 0.0
    %1736 = vmatpush1.msra.mxu0 0.0
    %1737 = vmatprep.subr.mxu0 0.0
    %1738 = vmatpush1.msra.mxu0 0.0
    %1739 = vmatprep.subr.mxu0 0.0
    %1740 = vmatpush1.msra.mxu0 0.0
    %1741 = vmatprep.subr.mxu0 0.0
    %1742 = vmatpush1.msra.mxu0 0.0
    %1743 = vmatprep.subr.mxu0 0.0
    %1744 = vmatpush1.msra.mxu0 0.0
    %1745 = vmatprep.subr.mxu0 0.0
    %1746 = vmatpush1.msra.mxu0 0.0
    %1747 = vmatprep.subr.mxu0 0.0
    %1748 = vmatpush1.msra.mxu0 0.0
    %1749 = vmatprep.mubr.f32.mxu0 0.0
    %1750 = vmatmul.mubr.f32.gmra.mrb[0].mxu0 %v1604
    %v1751 = vpop.f32.mrb[0].mxu0
    %v1752 = vadd.f32 %v998, %v1751
    %v1753 = vpop.f32.mrb[0].mxu0
    %1754 = vmatprep.mubr.f32.mxu0 0.0
    %1755 = vmatmul.mubr.f32.gmra.mrb[0].mxu0 %v1605
    %v1756 = vpop.f32.mrb[0].mxu0
    %v1757 = vadd.f32 %v998, %v1756
    %v1758 = vpop.f32.mrb[0].mxu0
    %1759 = vdwg.mxu0
    %v1760 = vld [vmem:[#allocation2 + $0x90] sm:$0xff]
    %v1761 = vld [vmem:[#allocation2 + $0x98] sm:$0xff]
    %v1762 = vld [vmem:[#allocation2 + $0xa0] sm:$0xff]
    %v1763 = vld [vmem:[#allocation2 + $0xa8] sm:$0xff]
    %v1764 = vld [vmem:[#allocation2 + $0xb0] sm:$0xff]
    %v1765 = vld [vmem:[#allocation2 + $0xb8] sm:$0xff]
    %v1766 = vadd.f32 %v1760, %v1675
    %v1767 = vadd.f32 %v1763, %v1681
    %v1768 = vxor.u32 %v1766, 2147483648
    %v1769 = vxor.u32 %v1767, 2147483648
    %v1770 = vmul.f32 %v1768, 1.442695
    %v1771 = vpow.pop %v1770
    %v1772 = vmul.f32 %v1769, 1.442695
    %v1773 = vpow.pop %v1772
    %v1774 = vadd.f32 %v1771, 1.0
    %v1775 = vadd.f32 %v1773, 1.0
    %v1776 = vrcp.pop %v1774
    %v1777 = vmul.f32 1.0, %v1776
    %v1778 = vrcp.pop %v1775
    %v1779 = vmul.f32 1.0, %v1778
    %v1780 = vadd.f32 %v1761, %v1677
    %v1781 = vadd.f32 %v1764, %v1683
    %v1782 = vxor.u32 %v1780, 2147483648
    %v1783 = vxor.u32 %v1781, 2147483648
    %v1784 = vmul.f32 %v1782, 1.442695
    %v1785 = vpow.pop %v1784
    %v1786 = vmul.f32 %v1783, 1.442695
    %v1787 = vpow.pop %v1786
    %v1788 = vadd.f32 %v1785, 1.0
    %v1789 = vadd.f32 %v1787, 1.0
    %v1790 = vrcp.pop %v1788
    %v1791 = vmul.f32 1.0, %v1790
    %v1792 = vrcp.pop %v1789
    %v1793 = vmul.f32 1.0, %v1792
    %v1794 = vmul.f32 %v1777, %v1752
    %v1795 = vmul.f32 %v1779, %v1757
    %v1796 = vadd.f32 %v1762, %v1794
    %v1797 = vadd.f32 %v1765, %v1795
    %v1798 = vtanh.pop %v1796
    %v1799 = vtanh.pop %v1797
    %v1800 = vsub.f32 1.0, %v1791
    %v1801 = vsub.f32 1.0, %v1793
    %v1802 = vmul.f32 %v1800, %v1798
    %v1803 = vmul.f32 %v1801, %v1799
    %v1804 = vmul.f32 %v1791, %v1604
    %v1805 = vmul.f32 %v1793, %v1605
    %v1806 = vadd.f32 %v1802, %v1804
    %v1807 = vadd.f32 %v1803, %v1805
    %1808 = vst [vmem:[#allocation3 + $0x30] sm:$0xff] %v1806
    %1809 = vst [vmem:[#allocation3 + $0x38] sm:$0xff] %v1807
    %v1810 = vld [vmem:[#allocation3] sm:$0xff]
    %v1811 = vld [vmem:[#allocation3 + $0x8] sm:$0xff]
    %v1812 = vld [vmem:[#allocation3 + $0x10] sm:$0xff]
    %v1813 = vld [vmem:[#allocation3 + $0x18] sm:$0xff]
    %v1814 = vld [vmem:[#allocation3 + $0x20] sm:$0xff]
    %v1815 = vld [vmem:[#allocation3 + $0x28] sm:$0xff]
    %v1816 = vld [vmem:[#allocation3 + $0x30] sm:$0xff]
    %v1817 = vld [vmem:[#allocation3 + $0x38] sm:$0xff]
    %v1818 = vld [vmem:[#allocation10] sm:$0xff]
    %v1819 = vld [vmem:[#allocation10 + $0x8] sm:$0xff]
    %v1820 = vld [vmem:[#allocation10 + $0x10] sm:$0xff]
    %v1821 = vld [vmem:[#allocation10 + $0x18] sm:$0xff]
    %v1822 = vld [vmem:[#allocation10 + $0x20] sm:$0xff]
    %v1823 = vld [vmem:[#allocation10 + $0x28] sm:$0xff]
    %v1824 = vld [vmem:[#allocation10 + $0x30] sm:$0xff]
    %v1825 = vld [vmem:[#allocation10 + $0x38] sm:$0xff]
    %v1826 = vld [vmem:[#allocation10 + $0x40] sm:$0xff]
    %v1827 = vld [vmem:[#allocation10 + $0x48] sm:$0xff]
    %v1828 = vld [vmem:[#allocation10 + $0x50] sm:$0xff]
    %v1829 = vld [vmem:[#allocation10 + $0x58] sm:$0xff]
    %v1830 = vld [vmem:[#allocation10 + $0x60] sm:$0xff]
    %v1831 = vld [vmem:[#allocation10 + $0x68] sm:$0xff]
    %v1832 = vld [vmem:[#allocation10 + $0x70] sm:$0xff]
    %v1833 = vld [vmem:[#allocation10 + $0x78] sm:$0xff]
    %v1834 = vld [vmem:[%s11] sm:$0x1]
    %v1836 = vlaneseq
    %v1837 = vshrl.u32 %v1836, 7
    %v1838 = vsub.s32 0, %v1837
    %v1839 = vrot.slane %v1834, %v1838
    %1841 = vmatprep.subr.mxu0 0.0
    %1842 = vmatpush1.msra.mxu0 %v1818
    %1843 = vmatprep.subr.mxu0 0.0
    %1844 = vmatpush1.msra.mxu0 %v1819
    %1845 = vmatprep.subr.mxu0 0.0
    %1846 = vmatpush1.msra.mxu0 %v1820
    %1847 = vmatprep.subr.mxu0 0.0
    %1848 = vmatpush1.msra.mxu0 %v1821
    %1849 = vmatprep.subr.mxu0 0.0
    %1850 = vmatpush1.msra.mxu0 %v1822
    %1851 = vmatprep.subr.mxu0 0.0
    %1852 = vmatpush1.msra.mxu0 %v1823
    %1853 = vmatprep.subr.mxu0 0.0
    %1854 = vmatpush1.msra.mxu0 %v1824
    %1855 = vmatprep.subr.mxu0 0.0
    %1856 = vmatpush1.msra.mxu0 %v1825
    %1857 = vmatprep.subr.mxu0 0.0
    %1858 = vmatpush1.msra.mxu0 %v1826
    %1859 = vmatprep.subr.mxu0 0.0
    %1860 = vmatpush1.msra.mxu0 %v1827
    %1861 = vmatprep.subr.mxu0 0.0
    %1862 = vmatpush1.msra.mxu0 %v1828
    %1863 = vmatprep.subr.mxu0 0.0
    %1864 = vmatpush1.msra.mxu0 %v1829
    %1865 = vmatprep.subr.mxu0 0.0
    %1866 = vmatpush1.msra.mxu0 %v1830
    %1867 = vmatprep.subr.mxu0 0.0
    %1868 = vmatpush1.msra.mxu0 %v1831
    %1869 = vmatprep.subr.mxu0 0.0
    %1870 = vmatpush1.msra.mxu0 %v1832
    %1871 = vmatprep.subr.mxu0 0.0
    %1872 = vmatpush1.msra.mxu0 %v1833
    %1873 = vmatprep.subr.mxu0 0.0
    %1874 = vmatpush1.msra.mxu0 0.0
    %1875 = vmatprep.subr.mxu0 0.0
    %1876 = vmatpush1.msra.mxu0 0.0
    %1877 = vmatprep.subr.mxu0 0.0
    %1878 = vmatpush1.msra.mxu0 0.0
    %1879 = vmatprep.subr.mxu0 0.0
    %1880 = vmatpush1.msra.mxu0 0.0
    %1881 = vmatprep.subr.mxu0 0.0
    %1882 = vmatpush1.msra.mxu0 0.0
    %1883 = vmatprep.subr.mxu0 0.0
    %1884 = vmatpush1.msra.mxu0 0.0
    %1885 = vmatprep.subr.mxu0 0.0
    %1886 = vmatpush1.msra.mxu0 0.0
    %1887 = vmatprep.subr.mxu0 0.0
    %1888 = vmatpush1.msra.mxu0 0.0
    %1889 = vmatprep.subr.mxu0 0.0
    %1890 = vmatpush1.msra.mxu0 0.0
    %1891 = vmatprep.subr.mxu0 0.0
    %1892 = vmatpush1.msra.mxu0 0.0
    %1893 = vmatprep.subr.mxu0 0.0
    %1894 = vmatpush1.msra.mxu0 0.0
    %1895 = vmatprep.subr.mxu0 0.0
    %1896 = vmatpush1.msra.mxu0 0.0
    %1897 = vmatprep.subr.mxu0 0.0
    %1898 = vmatpush1.msra.mxu0 0.0
    %1899 = vmatprep.subr.mxu0 0.0
    %1900 = vmatpush1.msra.mxu0 0.0
    %1901 = vmatprep.subr.mxu0 0.0
    %1902 = vmatpush1.msra.mxu0 0.0
    %1903 = vmatprep.subr.mxu0 0.0
    %1904 = vmatpush1.msra.mxu0 0.0
    %1905 = vmatprep.mubr.f32.mxu0 0.0
    %1906 = vmatmul.mubr.f32.gmra.mrb[0].mxu0 %v1810
    %v1907 = vpop.f32.mrb[0].mxu0
    %v1908 = vadd.f32 %v1839, %v1907
    %v1909 = vpop.f32.mrb[0].mxu0
    %1910 = vmatprep.mubr.f32.mxu0 0.0
    %1911 = vmatmul.mubr.f32.gmra.mrb[0].mxu0 %v1811
    %v1912 = vpop.f32.mrb[0].mxu0
    %v1913 = vadd.f32 %v1839, %v1912
    %v1914 = vpop.f32.mrb[0].mxu0
    %1915 = vmatprep.mubr.f32.mxu0 0.0
    %1916 = vmatmul.mubr.f32.gmra.mrb[0].mxu0 %v1812
    %v1917 = vpop.f32.mrb[0].mxu0
    %v1918 = vadd.f32 %v1839, %v1917
    %v1919 = vpop.f32.mrb[0].mxu0
    %1920 = vmatprep.mubr.f32.mxu0 0.0
    %1921 = vmatmul.mubr.f32.gmra.mrb[0].mxu0 %v1813
    %v1922 = vpop.f32.mrb[0].mxu0
    %v1923 = vadd.f32 %v1839, %v1922
    %v1924 = vpop.f32.mrb[0].mxu0
    %1925 = vmatprep.mubr.f32.mxu0 0.0
    %1926 = vmatmul.mubr.f32.gmra.mrb[0].mxu0 %v1814
    %v1927 = vpop.f32.mrb[0].mxu0
    %v1928 = vadd.f32 %v1839, %v1927
    %v1929 = vpop.f32.mrb[0].mxu0
    %1930 = vmatprep.mubr.f32.mxu0 0.0
    %1931 = vmatmul.mubr.f32.gmra.mrb[0].mxu0 %v1815
    %v1932 = vpop.f32.mrb[0].mxu0
    %v1933 = vadd.f32 %v1839, %v1932
    %v1934 = vpop.f32.mrb[0].mxu0
    %1935 = vmatprep.mubr.f32.mxu0 0.0
    %1936 = vmatmul.mubr.f32.gmra.mrb[0].mxu0 %v1816
    %v1937 = vpop.f32.mrb[0].mxu0
    %v1938 = vadd.f32 %v1839, %v1937
    %v1939 = vpop.f32.mrb[0].mxu0
    %1940 = vmatprep.mubr.f32.mxu0 0.0
    %1941 = vmatmul.mubr.f32.gmra.mrb[0].mxu0 %v1817
    %v1942 = vpop.f32.mrb[0].mxu0
    %v1943 = vadd.f32 %v1839, %v1942
    %v1944 = vpop.f32.mrb[0].mxu0
    %1945 = vdwg.mxu0
    %1946 = vst [vmem:[#allocation12] sm:$0xff] %v1908
    %1947 = vst [vmem:[#allocation12 + $0x8] sm:$0xff] %v1913
    %1948 = vst [vmem:[#allocation12 + $0x10] sm:$0xff] %v1918
    %1949 = vst [vmem:[#allocation12 + $0x18] sm:$0xff] %v1923
    %1950 = vst [vmem:[#allocation12 + $0x20] sm:$0xff] %v1928
    %1951 = vst [vmem:[#allocation12 + $0x28] sm:$0xff] %v1933
    %1952 = vst [vmem:[#allocation12 + $0x30] sm:$0xff] %v1938
    %1953 = vst [vmem:[#allocation12 + $0x38] sm:$0xff] %v1943
    // Predicated region
    $region66: #{tpu_custom_call.1} parent=1 // pred_check
      _
    $region67: #{tpu_custom_call.1} parent=1 // pred_check_branch
      %1955 = sbr.rel (0) target = $region69
    $region68: #{tpu_custom_call.1} parent=1 // pred_region
      %s1957 = ssub.s32 1024, 1024
      %1958 = vsyncadd [#allocation6], %s1957
      %s1959 = sshll.u32 [#allocation12], 4
      %s1960 = int_to_ptr.vmem [resolvable:$true] %s1959
      %1965 = dma.vmem_to_hbm [thread:$0]  %s1960, 1024, %s12, [#allocation6], 128, 128, 8
    $region69: #{tpu_custom_call.1} parent=1 // pred_fallthru
      _
    // Predicated region
    $region70: #{tpu_custom_call.1} parent=1 // pred_check
      _
    $region71: #{tpu_custom_call.1} parent=1 // pred_check_branch
      %1967 = sbr.rel (0) target = $region73
    $region72: #{tpu_custom_call.1} parent=1 // pred_region
      %1968 = dma.done [#allocation6], 1024
    $region73: #{tpu_custom_call.1} parent=1 // pred_fallthru
      _
    %1969 = vsyncpa [#allocation5], 1
    %1970 = vsyncpa [#allocation8], 1
    %1971 = vsyncpa [#allocation11], 1
    %1972 = vsyncpa [#allocation6], 1

</llo_original>
